<compile_context>
chip_gen: v7x
topology: tpu7x:2x2x1
jax: 0.10.0
libtpu: 0.0.40
codegen_flags: <defaults>
</compile_context>

<pallas_src>
import functools
import math

import jax
import jax.numpy as jnp
from jax.experimental import pallas as pl
from jax.experimental.pallas import tpu as pltpu

LANE = 128
SUBLANE = 8


def _round_up(x, m):
    return (x + m - 1) // m * m


# ----------------------------- Pallas kernel --------------------------------

def _mlp_chain_kernel(n_layers, z_layer_idx, relu_flags, in_dim,
                      x_ref, w_ref, b_ref, z_ref, out_ref, h_scratch):
    """Fused Linear(+ReLU) chain over one (TB, *) batch tile.

    x_ref:     (TB, in_dim)           f32 input tile (unpadded, full last dim)
    w_ref:     (n_layers, D, D)       bf16 zero-padded weights, (in, out) layout
    b_ref:     (rows>=n_layers, D)    bf16 zero-padded biases (one row per layer)
    z_ref:     (TB, D)                bf16 bottleneck-z tap (padded, lane-dense)
    out_ref:   (TB, D)                bf16 final output (padded, lane-dense)
    h_scratch: (TB, D)                bf16 VMEM staging slab for the padded activation
    """
    # Zero-pad the input tile into a lane-dense bf16 activation slab in VMEM.
    h_scratch[...] = jnp.zeros_like(h_scratch)
    h_scratch[:, :in_dim] = x_ref[...].astype(jnp.bfloat16)
    h = h_scratch[...]                                       # (TB, D) bf16

    # Convert all biases once (hoisted out of the unrolled layer loop).
    b_all = b_ref[...].astype(jnp.float32)                   # (b_rows, D) f32

    for li in range(n_layers):                               # static Python unroll
        # Native bf16 x bf16 MXU matmul with f32 accumulation.
        acc = jnp.dot(h, w_ref[li], preferred_element_type=jnp.float32)
        acc = acc + b_all[li:li + 1, :]                      # f32 bias add (VPU)
        if relu_flags[li]:
            acc = jnp.maximum(acc, 0.0)
        if li == z_layer_idx:
            z_ref[...] = acc.astype(z_ref.dtype)
        h = acc.astype(jnp.bfloat16)                         # bf16 operand for next dot
    out_ref[...] = h


def multidomain_forward_pallas(x, packed, *, batch_tile=256):
    """Run the fused chain. Returns (z, out) at logical widths, bf16."""
    w_slab = packed["w_slab"]                                # (n_layers, D, D) bf16
    b_slab = packed["b_slab"]                                # (b_rows, D) bf16
    n_layers, D, _ = w_slab.shape
    z_idx = packed["z_layer_idx"]
    relu_flags = tuple(packed["relu_flags"])
    dims = packed["dims"]                                    # logical widths, len n_layers+1
    in_dim, z_dim, out_dim = dims[0], dims[z_idx + 1], dims[-1]

    B = x.shape[0]
    TB = min(batch_tile, B)
    assert TB % SUBLANE == 0, "batch tile must be a multiple of 8 sublanes"
    assert B % TB == 0, "batch must be a multiple of batch_tile"

    kernel = functools.partial(_mlp_chain_kernel, n_layers, z_idx, relu_flags, in_dim)

    # Advisory cost estimate (logical flops; HBM bytes actually touched).
    flops = 2 * B * sum(dims[i] * dims[i + 1] for i in range(n_layers))
    bytes_accessed = (x.size * x.dtype.itemsize
                      + 2 * (w_slab.size + b_slab.size)      # bf16 weight/bias slabs
                      + 2 * 2 * B * D)                       # two bf16 (B, D) outputs

    z_p, out_p = pl.pallas_call(
        kernel,
        grid=(B // TB,),
        in_specs=[
            # Unpadded input tile: full last dim (== array dim) is a legal block shape.
            pl.BlockSpec((TB, in_dim), lambda i: (i, 0)),
            # Resident weight/bias slabs: constant index_map, single-buffered.
            pl.BlockSpec((n_layers, D, D), lambda i: (0, 0, 0),
                         pipeline_mode=pl.Buffered(1)),
            pl.BlockSpec(b_slab.shape, lambda i: (0, 0),
                         pipeline_mode=pl.Buffered(1)),
        ],
        out_specs=(
            pl.BlockSpec((TB, D), lambda i: (i, 0)),
            pl.BlockSpec((TB, D), lambda i: (i, 0)),
        ),
        out_shape=(
            jax.ShapeDtypeStruct((B, D), jnp.bfloat16),
            jax.ShapeDtypeStruct((B, D), jnp.bfloat16),
        ),
        scratch_shapes=[pltpu.VMEM((TB, D), jnp.bfloat16)],
        compiler_params=pltpu.CompilerParams(
            dimension_semantics=("parallel",)),
        cost_estimate=pl.CostEstimate(
            flops=flops, transcendentals=0, bytes_accessed=bytes_accessed),
    )(x, w_slab, b_slab)

    # Consumers that can work on padded slabs should take z_p / out_p directly.
    return z_p[:, :z_dim], out_p[:, :out_dim]


# --------------------------- parameter construction -------------------------

def _init_linear(key, in_f, out_f):
    """Deterministic PyTorch-style Linear init; weight stored as (in_f, out_f)."""
    kw, kb = jax.random.split(key)
    bound = 1.0 / math.sqrt(in_f)
    w = jax.random.uniform(kw, (in_f, out_f), jnp.float32, -bound, bound)
    b = jax.random.uniform(kb, (out_f,), jnp.float32, -bound, bound)
    return w, b


def init_multidomain_params(key, input_size_list, layers, n_domain):
    params = {"enc_domain": [], "encoder": [], "z": None,
              "decoder": [], "dec_domain": []}
    keys = iter(jax.random.split(key, 4 * n_domain + 4 * len(layers) + 8))

    for d in range(n_domain):
        params["enc_domain"].append(_init_linear(next(keys), input_size_list[d], layers[0]))
    for i in range(1, len(layers) - 1):
        params["encoder"].append(_init_linear(next(keys), layers[i - 1], layers[i]))
    params["z"] = _init_linear(next(keys), layers[-2], layers[-1])
    for i in range(len(layers) - 2, -1, -1):
        params["decoder"].append(_init_linear(next(keys), layers[i + 1], layers[i]))
    for d in range(n_domain):
        params["dec_domain"].append(_init_linear(next(keys), layers[0], input_size_list[d]))
    return params


def build_chain(params, domain_in, domain_out):
    """Flatten the forward pass into an ordered (W, b) chain + relu flags + z index."""
    # NOTE: weights here are already (in, out); a real PyTorch checkpoint stores (out, in)
    # and would need a transpose when packing.
    chain, relu_flags = [], []
    chain.append(params["enc_domain"][domain_in]); relu_flags.append(True)
    for wb in params["encoder"]:
        chain.append(wb); relu_flags.append(True)
    chain.append(params["z"]); relu_flags.append(False)
    z_layer_idx = len(chain) - 1
    for wb in params["decoder"]:
        chain.append(wb); relu_flags.append(True)
    chain.append(params["dec_domain"][domain_out]); relu_flags.append(True)
    return chain, relu_flags, z_layer_idx


def pack_chain(chain, relu_flags, z_layer_idx):
    """Zero-pad every layer to a common lane-aligned width D and pack all weights /
    biases into single bf16 slabs (one DMA stream each, halves HBM bytes)."""
    dims = [chain[0][0].shape[0]] + [w.shape[1] for (w, _) in chain]
    D = _round_up(max(dims), LANE)
    n_layers = len(chain)
    b_rows = _round_up(n_layers, SUBLANE)

    w_slab = jnp.zeros((n_layers, D, D), jnp.float32)
    b_slab = jnp.zeros((b_rows, D), jnp.float32)
    for li, (w, b) in enumerate(chain):
        w_slab = w_slab.at[li, :w.shape[0], :w.shape[1]].set(w)
        b_slab = b_slab.at[li, :b.shape[0]].set(b)

    return {
        "w_slab": w_slab.astype(jnp.bfloat16),
        "b_slab": b_slab.astype(jnp.bfloat16),
        "relu_flags": tuple(relu_flags),
        "z_layer_idx": z_layer_idx,
        "dims": dims,
        "D": D,
    }


# ------------------------------- pure-JAX ref --------------------------------

def multidomain_forward_ref(x, packed):
    """Same math as the kernel: bf16 matmul operands, f32 accumulate, f32 bias/ReLU."""
    dims, D = packed["dims"], packed["D"]
    n_layers = len(dims) - 1
    z_idx = packed["z_layer_idx"]
    relu = packed["relu_flags"]
    w32 = packed["w_slab"].astype(jnp.float32)
    b32 = packed["b_slab"].astype(jnp.float32)

    h = jnp.zeros((x.shape[0], D), jnp.bfloat16).at[:, :dims[0]].set(
        x.astype(jnp.bfloat16))
    z = None
    for li in range(n_layers):
        acc = jax.lax.dot(h.astype(jnp.float32), w32[li],
                          precision=jax.lax.Precision.HIGHEST) + b32[li][None, :]
        if relu[li]:
            acc = jnp.maximum(acc, 0.0)
        if li == z_idx:
            z = acc[:, :dims[li + 1]].astype(jnp.bfloat16)
        h = acc.astype(jnp.bfloat16)
    return z, h[:, :dims[-1]]


# ----------------------------------- main ------------------------------------

if __name__ == "__main__":
    # Config consistent with the module: 2 domains, layers [32, 16, 8].
    input_size_list = [24, 40]
    layers = [32, 16, 8]
    n_domain = 2
    batch = 512          # 2 batch tiles of 256 rows -> pipeline + v7x 2-TC sharding engage
    batch_tile = 256
    domain_in, domain_out = 0, 1

    key = jax.random.PRNGKey(0)
    k_param, k_x = jax.random.split(key)
    params = init_multidomain_params(k_param, input_size_list, layers, n_domain)
    x = jax.random.normal(k_x, (batch, input_size_list[domain_in]), jnp.float32)

    chain, relu_flags, z_idx = build_chain(params, domain_in, domain_out)
    packed = pack_chain(chain, relu_flags, z_idx)

    z, out = multidomain_forward_pallas(x, packed, batch_tile=batch_tile)
    z, out = jax.block_until_ready((z, out))

    z_ref, out_ref = multidomain_forward_ref(x, packed)

    assert z.shape == (batch, layers[-1])
    assert out.shape == (batch, input_size_list[domain_out])
    assert jnp.allclose(z.astype(jnp.float32), z_ref.astype(jnp.float32),
                        atol=2e-2, rtol=2e-2)
    assert jnp.allclose(out.astype(jnp.float32), out_ref.astype(jnp.float32),
                        atol=2e-2, rtol=2e-2)

    print("KERNEL_OK")
</pallas_src>

<mosaic_0001>
module attributes {stable_mosaic.version = 11 : i64} {
  func.func @_mlp_chain_kernel(%arg0: i32, %arg1: memref<256x24xf32, #tpu.memory_space<vmem>>, %arg2: memref<6x128x128xbf16, #tpu.memory_space<vmem>>, %arg3: memref<8x128xbf16, #tpu.memory_space<vmem>>, %arg4: memref<256x128xbf16, #tpu.memory_space<vmem>>, %arg5: memref<256x128xbf16, #tpu.memory_space<vmem>>, %arg6: memref<256x128xbf16, #tpu.memory_space<vmem>>) attributes {dimension_semantics = [#tpu.dimension_semantics<parallel>], iteration_bounds = array<i64: 2>, scalar_prefetch = 0 : i64, scratch_operands = 1 : i64, tpu.core_type = #tpu.core_type<tc>, window_params = [{transform_indices = @transform_0, window_bounds = array<i64: 256, 24>}, {pipeline_mode = #tpu.pipeline_mode<synchronous>, transform_indices = @transform_1, window_bounds = array<i64: 6, 128, 128>}, {pipeline_mode = #tpu.pipeline_mode<synchronous>, transform_indices = @transform_2, window_bounds = array<i64: 8, 128>}, {transform_indices = @transform_3, window_bounds = array<i64: 256, 128>}, {transform_indices = @transform_4, window_bounds = array<i64: 256, 128>}]} {
    %cst = arith.constant 0.000000e+00 : bf16
    %0 = vector.broadcast %cst : bf16 to vector<256x128xbf16>
    %c0 = arith.constant 0 : index
    %c0_0 = arith.constant 0 : index
    %1 = vector.load %arg6[%c0, %c0_0] : memref<256x128xbf16, #tpu.memory_space<vmem>>, vector<256x128xbf16>
    tpu.vector_store %arg6[%c0, %c0_0], %0 {strides = array<i32>} : memref<256x128xbf16, #tpu.memory_space<vmem>>, vector<256x128xbf16>,
    %c0_1 = arith.constant 0 : index
    %c0_2 = arith.constant 0 : index
    %2 = vector.load %arg1[%c0_1, %c0_2] : memref<256x24xf32, #tpu.memory_space<vmem>>, vector<256x24xf32>
    %3 = arith.truncf %2 : vector<256x24xf32> to vector<256x24xbf16>
    %c0_3 = arith.constant 0 : index
    %c0_4 = arith.constant 0 : index
    %4 = vector.load %arg6[%c0_3, %c0_4] : memref<256x128xbf16, #tpu.memory_space<vmem>>, vector<256x24xbf16>
    tpu.vector_store %arg6[%c0_3, %c0_4], %3 {strides = array<i32>} : memref<256x128xbf16, #tpu.memory_space<vmem>>, vector<256x24xbf16>,
    %c0_5 = arith.constant 0 : index
    %c0_6 = arith.constant 0 : index
    %5 = vector.load %arg6[%c0_5, %c0_6] : memref<256x128xbf16, #tpu.memory_space<vmem>>, vector<256x128xbf16>
    %c0_7 = arith.constant 0 : index
    %c0_8 = arith.constant 0 : index
    %6 = vector.load %arg3[%c0_7, %c0_8] : memref<8x128xbf16, #tpu.memory_space<vmem>>, vector<8x128xbf16>
    %7 = arith.extf %6 : vector<8x128xbf16> to vector<8x128xf32>
    %c0_9 = arith.constant 0 : index
    %c0_10 = arith.constant 0 : index
    %c0_11 = arith.constant 0 : index
    %8 = vector.load %arg2[%c0_9, %c0_10, %c0_11] : memref<6x128x128xbf16, #tpu.memory_space<vmem>>, vector<1x128x128xbf16>
    %9 = vector.shape_cast %8 : vector<1x128x128xbf16> to vector<128x128xbf16>
    %cst_12 = arith.constant dense<0.000000e+00> : vector<256x128xf32>
    %10 = tpu.matmul %5, %9, %cst_12 {dimension_numbers = #tpu.dot_dimension_numbers<[1], [0], [0], [1], [0, 0, 1, 1], [], []>} : vector<256x128xbf16>, vector<128x128xbf16>, vector<256x128xf32> -> vector<256x128xf32>
    %11 = vector.extract_strided_slice %7 {offsets = [0, 0], sizes = [1, 128], strides = [1, 1]} : vector<8x128xf32> to vector<1x128xf32>
    %12 = vector.broadcast %11 : vector<1x128xf32> to vector<256x128xf32>
    %13 = arith.addf %10, %12 : vector<256x128xf32>
    %cst_13 = arith.constant 0.000000e+00 : f32
    %14 = vector.broadcast %cst_13 : f32 to vector<256x128xf32>
    %15 = arith.maximumf %13, %14 : vector<256x128xf32>
    %16 = arith.truncf %15 : vector<256x128xf32> to vector<256x128xbf16>
    %c1 = arith.constant 1 : index
    %c0_14 = arith.constant 0 : index
    %c0_15 = arith.constant 0 : index
    %17 = vector.load %arg2[%c1, %c0_14, %c0_15] : memref<6x128x128xbf16, #tpu.memory_space<vmem>>, vector<1x128x128xbf16>
    %18 = vector.shape_cast %17 : vector<1x128x128xbf16> to vector<128x128xbf16>
    %cst_16 = arith.constant dense<0.000000e+00> : vector<256x128xf32>
    %19 = tpu.matmul %16, %18, %cst_16 {dimension_numbers = #tpu.dot_dimension_numbers<[1], [0], [0], [1], [0, 0, 1, 1], [], []>} : vector<256x128xbf16>, vector<128x128xbf16>, vector<256x128xf32> -> vector<256x128xf32>
    %20 = vector.extract_strided_slice %7 {offsets = [1, 0], sizes = [1, 128], strides = [1, 1]} : vector<8x128xf32> to vector<1x128xf32>
    %21 = vector.broadcast %20 : vector<1x128xf32> to vector<256x128xf32>
    %22 = arith.addf %19, %21 : vector<256x128xf32>
    %cst_17 = arith.constant 0.000000e+00 : f32
    %23 = vector.broadcast %cst_17 : f32 to vector<256x128xf32>
    %24 = arith.maximumf %22, %23 : vector<256x128xf32>
    %25 = arith.truncf %24 : vector<256x128xf32> to vector<256x128xbf16>
    %c2 = arith.constant 2 : index
    %c0_18 = arith.constant 0 : index
    %c0_19 = arith.constant 0 : index
    %26 = vector.load %arg2[%c2, %c0_18, %c0_19] : memref<6x128x128xbf16, #tpu.memory_space<vmem>>, vector<1x128x128xbf16>
    %27 = vector.shape_cast %26 : vector<1x128x128xbf16> to vector<128x128xbf16>
    %cst_20 = arith.constant dense<0.000000e+00> : vector<256x128xf32>
    %28 = tpu.matmul %25, %27, %cst_20 {dimension_numbers = #tpu.dot_dimension_numbers<[1], [0], [0], [1], [0, 0, 1, 1], [], []>} : vector<256x128xbf16>, vector<128x128xbf16>, vector<256x128xf32> -> vector<256x128xf32>
    %29 = vector.extract_strided_slice %7 {offsets = [2, 0], sizes = [1, 128], strides = [1, 1]} : vector<8x128xf32> to vector<1x128xf32>
    %30 = vector.broadcast %29 : vector<1x128xf32> to vector<256x128xf32>
    %31 = arith.addf %28, %30 : vector<256x128xf32>
    %32 = arith.truncf %31 : vector<256x128xf32> to vector<256x128xbf16>
    %c0_21 = arith.constant 0 : index
    %c0_22 = arith.constant 0 : index
    %33 = vector.load %arg4[%c0_21, %c0_22] : memref<256x128xbf16, #tpu.memory_space<vmem>>, vector<256x128xbf16>
    tpu.vector_store %arg4[%c0_21, %c0_22], %32 {strides = array<i32>} : memref<256x128xbf16, #tpu.memory_space<vmem>>, vector<256x128xbf16>,
    %34 = arith.truncf %31 : vector<256x128xf32> to vector<256x128xbf16>
    %c3 = arith.constant 3 : index
    %c0_23 = arith.constant 0 : index
    %c0_24 = arith.constant 0 : index
    %35 = vector.load %arg2[%c3, %c0_23, %c0_24] : memref<6x128x128xbf16, #tpu.memory_space<vmem>>, vector<1x128x128xbf16>
    %36 = vector.shape_cast %35 : vector<1x128x128xbf16> to vector<128x128xbf16>
    %cst_25 = arith.constant dense<0.000000e+00> : vector<256x128xf32>
    %37 = tpu.matmul %34, %36, %cst_25 {dimension_numbers = #tpu.dot_dimension_numbers<[1], [0], [0], [1], [0, 0, 1, 1], [], []>} : vector<256x128xbf16>, vector<128x128xbf16>, vector<256x128xf32> -> vector<256x128xf32>
    %38 = vector.extract_strided_slice %7 {offsets = [3, 0], sizes = [1, 128], strides = [1, 1]} : vector<8x128xf32> to vector<1x128xf32>
    %39 = vector.broadcast %38 : vector<1x128xf32> to vector<256x128xf32>
    %40 = arith.addf %37, %39 : vector<256x128xf32>
    %cst_26 = arith.constant 0.000000e+00 : f32
    %41 = vector.broadcast %cst_26 : f32 to vector<256x128xf32>
    %42 = arith.maximumf %40, %41 : vector<256x128xf32>
    %43 = arith.truncf %42 : vector<256x128xf32> to vector<256x128xbf16>
    %c4 = arith.constant 4 : index
    %c0_27 = arith.constant 0 : index
    %c0_28 = arith.constant 0 : index
    %44 = vector.load %arg2[%c4, %c0_27, %c0_28] : memref<6x128x128xbf16, #tpu.memory_space<vmem>>, vector<1x128x128xbf16>
    %45 = vector.shape_cast %44 : vector<1x128x128xbf16> to vector<128x128xbf16>
    %cst_29 = arith.constant dense<0.000000e+00> : vector<256x128xf32>
    %46 = tpu.matmul %43, %45, %cst_29 {dimension_numbers = #tpu.dot_dimension_numbers<[1], [0], [0], [1], [0, 0, 1, 1], [], []>} : vector<256x128xbf16>, vector<128x128xbf16>, vector<256x128xf32> -> vector<256x128xf32>
    %47 = vector.extract_strided_slice %7 {offsets = [4, 0], sizes = [1, 128], strides = [1, 1]} : vector<8x128xf32> to vector<1x128xf32>
    %48 = vector.broadcast %47 : vector<1x128xf32> to vector<256x128xf32>
    %49 = arith.addf %46, %48 : vector<256x128xf32>
    %cst_30 = arith.constant 0.000000e+00 : f32
    %50 = vector.broadcast %cst_30 : f32 to vector<256x128xf32>
    %51 = arith.maximumf %49, %50 : vector<256x128xf32>
    %52 = arith.truncf %51 : vector<256x128xf32> to vector<256x128xbf16>
    %c5 = arith.constant 5 : index
    %c0_31 = arith.constant 0 : index
    %c0_32 = arith.constant 0 : index
    %53 = vector.load %arg2[%c5, %c0_31, %c0_32] : memref<6x128x128xbf16, #tpu.memory_space<vmem>>, vector<1x128x128xbf16>
    %54 = vector.shape_cast %53 : vector<1x128x128xbf16> to vector<128x128xbf16>
    %cst_33 = arith.constant dense<0.000000e+00> : vector<256x128xf32>
    %55 = tpu.matmul %52, %54, %cst_33 {dimension_numbers = #tpu.dot_dimension_numbers<[1], [0], [0], [1], [0, 0, 1, 1], [], []>} : vector<256x128xbf16>, vector<128x128xbf16>, vector<256x128xf32> -> vector<256x128xf32>
    %56 = vector.extract_strided_slice %7 {offsets = [5, 0], sizes = [1, 128], strides = [1, 1]} : vector<8x128xf32> to vector<1x128xf32>
    %57 = vector.broadcast %56 : vector<1x128xf32> to vector<256x128xf32>
    %58 = arith.addf %55, %57 : vector<256x128xf32>
    %cst_34 = arith.constant 0.000000e+00 : f32
    %59 = vector.broadcast %cst_34 : f32 to vector<256x128xf32>
    %60 = arith.maximumf %58, %59 : vector<256x128xf32>
    %61 = arith.truncf %60 : vector<256x128xf32> to vector<256x128xbf16>
    %c0_35 = arith.constant 0 : index
    %c0_36 = arith.constant 0 : index
    %62 = vector.load %arg5[%c0_35, %c0_36] : memref<256x128xbf16, #tpu.memory_space<vmem>>, vector<256x128xbf16>
    tpu.vector_store %arg5[%c0_35, %c0_36], %61 {strides = array<i32>} : memref<256x128xbf16, #tpu.memory_space<vmem>>, vector<256x128xbf16>,
    return
  }
  func.func @transform_0(%arg0: i32) -> (i32, i32) {
    %c0_i32 = arith.constant 0 : i32
    %c0_i32_0 = arith.constant 0 : i32
    return %arg0, %c0_i32 : i32, i32
  }
  func.func @transform_1(%arg0: i32) -> (i32, i32, i32) {
    %c0_i32 = arith.constant 0 : i32
    %c0_i32_0 = arith.constant 0 : i32
    %c0_i32_1 = arith.constant 0 : i32
    %c0_i32_2 = arith.constant 0 : i32
    return %c0_i32, %c0_i32_0, %c0_i32_1 : i32, i32, i32
  }
  func.func @transform_2(%arg0: i32) -> (i32, i32) {
    %c0_i32 = arith.constant 0 : i32
    %c0_i32_0 = arith.constant 0 : i32
    %c0_i32_1 = arith.constant 0 : i32
    return %c0_i32, %c0_i32_0 : i32, i32
  }
  func.func @transform_3(%arg0: i32) -> (i32, i32) {
    %c0_i32 = arith.constant 0 : i32
    %c0_i32_0 = arith.constant 0 : i32
    return %arg0, %c0_i32 : i32, i32
  }
  func.func @transform_4(%arg0: i32) -> (i32, i32) {
    %c0_i32 = arith.constant 0 : i32
    %c0_i32_0 = arith.constant 0 : i32
    return %arg0, %c0_i32 : i32, i32
  }
}

</mosaic_0001>

<llo_original>
// kernel: tpu_custom_call.1
$region0: #{tpu_custom_call.1}
  #allocation0 [shape = 'u32[]', space=smem, size = 0x4, offset = 0x4, fixed_abs, tag = 'smem constant byte address 0x4 - core index']
  #allocation1 [shape = 'u32[144,128]{1,0:T(1,128)}', space=vmem, size = 0x12000, scoped, tag = 'internal scratch']
  #allocation2 [shape = 'bf16[256,128]{1,0:T(16,128)(2,1)}', space=vmem, size = 0x10000, scoped, tag = 'scratch operand']
  %s0 = inlined_call_operand.vmem [shape: f32[512,24], index: 0, kind: input, shape index: {}]
  %s1 = inlined_call_operand.vmem [shape: bf16[6,128,128], index: 1, kind: input, shape index: {}]
  %s2 = inlined_call_operand.vmem [shape: bf16[8,128], index: 2, kind: input, shape index: {}]
  %s3 = inlined_call_operand.hbm [shape: bf16[512,128], index: 3, kind: output, shape index: {0}]
  %s4 = inlined_call_operand.hbm [shape: bf16[512,128], index: 4, kind: output, shape index: {1}]
  %5 = xla_tuple %s3, %s4
  %s6 = sld [smem:[#allocation0]]
  $region53: #{tpu_custom_call.1} parent=0
    _
  %s8 = ssub.s32 1, %s6
  %s9 = scalar_select 0, %s8, %s6
  $region1: #{tpu_custom_call.1} parent=0
    #allocation3 [shape = 'u8[131072]{0}', space=vmem, size = 0x20000, scoped, tag = 'output window, operand 0']
    #allocation4 [shape = 's32[2]{0}', space=sflag, size = 0x8, scoped, tag = 'scoped memory for tpu_custom_call.1']
    #allocation5 [shape = 'u8[131072]{0}', space=vmem, size = 0x20000, scoped, tag = 'output window, operand 1']
    #allocation6 [shape = 's32[2]{0}', space=sflag, size = 0x8, scoped, tag = 'scoped memory for tpu_custom_call.1']
    %10 = vsyncpa [#allocation4], 0
    %s11 = scalar_lea.sflag [#allocation4], 1
    %12 = vsyncpa %s11, 0
    %13 = vsyncpa [#allocation6], 0
    %s14 = scalar_lea.sflag [#allocation6], 1
    %15 = vsyncpa %s14, 0
    loop: start=0, step=1, limit=4
    $region2: #{tpu_custom_call.1} parent=1 // loop_pre_header
      _
    $region3: #{tpu_custom_call.1} parent=1 // loop_header
      %s17 = sphi 0, %s21
      %p18 = scmp.ge.s32.totalorder %s17, 4
      %s27 = sphi 0, %s29
      %s30 = sphi 0, %s27
      %s31 = sphi 0, %s30
      %s47 = sphi 0, %s31
      %s51 = sphi 0, %s51
      %s53 = sphi 0, %s51
      %s54 = sphi 0, %s53
      %s68 = sphi 0, %s54
      %s72 = sphi 0, %s72
      %s74 = sphi 0, %s72
      %s75 = sphi 0, %s74
      %s89 = sphi 0, %s75
      %s95 = sphi 0, %s97
      %s98 = sphi 0, %s95
      %s99 = sphi 0, %s98
      %s115 = sphi 0, %s99
      %s121 = sphi 0, %s123
      %s124 = sphi 0, %s121
      %s125 = sphi 0, %s124
      %s141 = sphi 0, %s125
    $region4: #{tpu_custom_call.1} parent=1 // loop_header_branch
      %20 = sbr.rel (%p18) target = $region8
    $region5: #{tpu_custom_call.1} parent=1 // loop_body
      %s22 = ssub.s32 %s17, 1
      %s23 = ssub.s32 %s17, 2
      %s24 = sadd.s32 %s17, 1
      %s25 = ssub.s32 %s17, %s24
      %p26 = scmp.eq.s32.totalorder %s25, 0
      %s28 = sadd.s32 %s27, 1
      %s29 = scalar_select %p26, %s27, %s28
      %p32 = pneg %p26
      %p33 = scmp.eq.s32.totalorder %s17, 1
      %p34 = por %p32, %p33
      %p35 = scmp.ne.s32.totalorder %s27, %s30
      %p36 = scmp.eq.s32.totalorder %s17, 0
      %p37 = por %p35, %p36
      %p38 = scmp.ne.s32.totalorder %s27, %s30
      %p39 = scmp.eq.s32.totalorder %s22, 1
      %p40 = por %p38, %p39
      %p41 = scmp.ne.s32.totalorder %s30, %s31
      %p42 = scmp.eq.s32.totalorder %s22, 0
      %p43 = por %p41, %p42
      %p44 = scmp.ne.s32.totalorder %s30, %s31
      %p45 = scmp.eq.s32.totalorder %s23, 1
      %p46 = por %p44, %p45
      %p48 = scmp.ne.s32.totalorder %s31, %s47
      %p49 = scmp.eq.s32.totalorder %s23, 0
      %p50 = por %p48, %p49
      %s52 = sadd.s32 %s51, 1
      %p55 = scmp.eq.s32.totalorder %s17, 1
      %p56 = scmp.ne.s32.totalorder %s51, %s53
      %p57 = scmp.eq.s32.totalorder %s17, 0
      %p58 = por %p56, %p57
      %p59 = scmp.ne.s32.totalorder %s51, %s53
      %p60 = scmp.eq.s32.totalorder %s22, 1
      %p61 = por %p59, %p60
      %p62 = scmp.ne.s32.totalorder %s53, %s54
      %p63 = scmp.eq.s32.totalorder %s22, 0
      %p64 = por %p62, %p63
      %p65 = scmp.ne.s32.totalorder %s53, %s54
      %p66 = scmp.eq.s32.totalorder %s23, 1
      %p67 = por %p65, %p66
      %p69 = scmp.ne.s32.totalorder %s54, %s68
      %p70 = scmp.eq.s32.totalorder %s23, 0
      %p71 = por %p69, %p70
      %s73 = sadd.s32 %s72, 1
      %p76 = scmp.eq.s32.totalorder %s17, 1
      %p77 = scmp.ne.s32.totalorder %s72, %s74
      %p78 = scmp.eq.s32.totalorder %s17, 0
      %p79 = por %p77, %p78
      %p80 = scmp.ne.s32.totalorder %s72, %s74
      %p81 = scmp.eq.s32.totalorder %s22, 1
      %p82 = por %p80, %p81
      %p83 = scmp.ne.s32.totalorder %s74, %s75
      %p84 = scmp.eq.s32.totalorder %s22, 0
      %p85 = por %p83, %p84
      %p86 = scmp.ne.s32.totalorder %s74, %s75
      %p87 = scmp.eq.s32.totalorder %s23, 1
      %p88 = por %p86, %p87
      %p90 = scmp.ne.s32.totalorder %s75, %s89
      %p91 = scmp.eq.s32.totalorder %s23, 0
      %p92 = por %p90, %p91
      %s93 = ssub.s32 %s17, %s24
      %p94 = scmp.eq.s32.totalorder %s93, 0
      %s96 = sadd.s32 %s95, 1
      %s97 = scalar_select %p94, %s95, %s96
      %p100 = pneg %p94
      %p101 = scmp.eq.s32.totalorder %s17, 1
      %p102 = por %p100, %p101
      %p103 = scmp.ne.s32.totalorder %s95, %s98
      %p104 = scmp.eq.s32.totalorder %s17, 0
      %p105 = por %p103, %p104
      %p106 = scmp.ne.s32.totalorder %s95, %s98
      %p107 = scmp.eq.s32.totalorder %s22, 1
      %p108 = por %p106, %p107
      %p109 = scmp.ne.s32.totalorder %s98, %s99
      %p110 = scmp.eq.s32.totalorder %s22, 0
      %p111 = por %p109, %p110
      %p112 = scmp.ne.s32.totalorder %s98, %s99
      %p113 = scmp.eq.s32.totalorder %s23, 1
      %p114 = por %p112, %p113
      %p116 = scmp.ne.s32.totalorder %s99, %s115
      %p117 = scmp.eq.s32.totalorder %s23, 0
      %p118 = por %p116, %p117
      %s119 = ssub.s32 %s17, %s24
      %p120 = scmp.eq.s32.totalorder %s119, 0
      %s122 = sadd.s32 %s121, 1
      %s123 = scalar_select %p120, %s121, %s122
      %p126 = pneg %p120
      %p127 = scmp.eq.s32.totalorder %s17, 1
      %p128 = por %p126, %p127
      %p129 = scmp.ne.s32.totalorder %s121, %s124
      %p130 = scmp.eq.s32.totalorder %s17, 0
      %p131 = por %p129, %p130
      %p132 = scmp.ne.s32.totalorder %s121, %s124
      %p133 = scmp.eq.s32.totalorder %s22, 1
      %p134 = por %p132, %p133
      %p135 = scmp.ne.s32.totalorder %s124, %s125
      %p136 = scmp.eq.s32.totalorder %s22, 0
      %p137 = por %p135, %p136
      %p138 = scmp.ne.s32.totalorder %s124, %s125
      %p139 = scmp.eq.s32.totalorder %s23, 1
      %p140 = por %p138, %p139
      %p142 = scmp.ne.s32.totalorder %s125, %s141
      %p143 = scmp.eq.s32.totalorder %s23, 0
      %p144 = por %p142, %p143
      %p145 = scmp.le.s32.totalorder 1, %s17
      %p146 = scmp.lt.s32.totalorder %s17, 3
      %p147 = pnand %p145, %p146
      %p148 = pneg %p147
      // Predicated region
      $region9: #{tpu_custom_call.1} parent=5 // pred_check
        _
      $region10: #{tpu_custom_call.1} parent=5 // pred_check_branch
        %150 = sbr.rel (%p147) target = $region12
      $region11: #{tpu_custom_call.1} parent=5 // pred_region
        %s151 = ssub.s32 %s17, 1
        // Predicated region
        $region13: #{tpu_custom_call.1} parent=11 // pred_check
          %p152 = pneg %p64
        $region14: #{tpu_custom_call.1} parent=11 // pred_check_branch
          %154 = sbr.rel (%p152) target = $region16
        $region15: #{tpu_custom_call.1} parent=11 // pred_region
          _
        $region16: #{tpu_custom_call.1} parent=11 // pred_fallthru
          _
        // Predicated region
        $region17: #{tpu_custom_call.1} parent=11 // pred_check
          %p155 = pneg %p85
        $region18: #{tpu_custom_call.1} parent=11 // pred_check_branch
          %157 = sbr.rel (%p155) target = $region20
        $region19: #{tpu_custom_call.1} parent=11 // pred_region
          _
        $region20: #{tpu_custom_call.1} parent=11 // pred_fallthru
          _
      $region12: #{tpu_custom_call.1} parent=5 // pred_fallthru
        _
      %p158 = scmp.lt.s32.totalorder %s17, 2
      // Predicated region
      $region21: #{tpu_custom_call.1} parent=5 // pred_check
        %p159 = pneg %p158
      $region22: #{tpu_custom_call.1} parent=5 // pred_check_branch
        %161 = sbr.rel (%p159) target = $region24
      $region23: #{tpu_custom_call.1} parent=5 // pred_region
        // Predicated region
        $region25: #{tpu_custom_call.1} parent=23 // pred_check
          %p162 = pneg %p37
        $region26: #{tpu_custom_call.1} parent=23 // pred_check_branch
          %164 = sbr.rel (%p162) target = $region28
        $region27: #{tpu_custom_call.1} parent=23 // pred_region
          %s165 = smul.u32 32, %s17
          %p166 = scmp.lt.s32.totalorder %s165, 63
          %s167 = scalar_select %p166, %s165, 63
          %s168 = smul.addr %s167, 8
          %s169 = scalar_lea.vmem %s0, %s168
          %s170 = smul.u32 32, %s17
        $region28: #{tpu_custom_call.1} parent=23 // pred_fallthru
          _
      $region24: #{tpu_custom_call.1} parent=5 // pred_fallthru
        _
      %p171 = scmp.le.s32.totalorder 1, %s17
      %p172 = scmp.lt.s32.totalorder %s17, 3
      %p173 = pnand %p171, %p172
      %p174 = pneg %p173
      // Predicated region
      $region29: #{tpu_custom_call.1} parent=5 // pred_check
        _
      $region30: #{tpu_custom_call.1} parent=5 // pred_check_branch
        %176 = sbr.rel (%p173) target = $region32
      $region31: #{tpu_custom_call.1} parent=5 // pred_region
        %s177 = ssub.s32 %s17, 1
        %s178 = smul.u32 32, %s22
        %p179 = scmp.lt.s32.totalorder %s178, 63
        %s180 = scalar_select %p179, %s178, 63
        %s181 = smul.addr %s180, 8
        %s182 = scalar_lea.vmem %s0, %s181
        %p183 = pneg %p43
        %p184 = pneg %p40
        %p185 = pneg %p64
        %p186 = pneg %p61
        %p187 = pneg %p85
        %p188 = pneg %p82
        %p189 = pneg %p111
        %p190 = pneg %p108
        %s191 = sand.u32 %s98, 1
        %s192 = scalar_lea.sflag [#allocation4], %s191
        %s193 = sand.u32 %s98, 1
        %s194 = smul.addr %s193, 128
        %s195 = scalar_lea.vmem [#allocation3], %s194
        %p196 = pneg %p137
        %p197 = pneg %p134
        %s198 = sand.u32 %s124, 1
        %s199 = scalar_lea.sflag [#allocation6], %s198
        %s200 = sand.u32 %s124, 1
        %s201 = smul.addr %s200, 128
        %s202 = scalar_lea.vmem [#allocation5], %s201
        %s203 = smul.u32 32, %s22
        %p204 = scmp.lt.s32.totalorder %s203, 63
        %s205 = scalar_select %p204, %s203, 63
        %s206 = smul.addr %s205, 8
        %s207 = scalar_lea.vmem %s0, %s206
        %s208 = smul.u32 32, %s22
        %s209 = smul.u32 32, %s22
        %s210 = smul.u32 32, %s22
        %212 = vst [vmem:[#allocation2] sm:$0xff] 0
        %213 = vst [vmem:[#allocation2 + $0x8] sm:$0xff] 0
        %214 = vst [vmem:[#allocation2 + $0x10] sm:$0xff] 0
        %215 = vst [vmem:[#allocation2 + $0x18] sm:$0xff] 0
        %216 = vst [vmem:[#allocation2 + $0x20] sm:$0xff] 0
        %217 = vst [vmem:[#allocation2 + $0x28] sm:$0xff] 0
        %218 = vst [vmem:[#allocation2 + $0x30] sm:$0xff] 0
        %219 = vst [vmem:[#allocation2 + $0x38] sm:$0xff] 0
        %220 = vst [vmem:[#allocation2 + $0x40] sm:$0xff] 0
        %221 = vst [vmem:[#allocation2 + $0x48] sm:$0xff] 0
        %222 = vst [vmem:[#allocation2 + $0x50] sm:$0xff] 0
        %223 = vst [vmem:[#allocation2 + $0x58] sm:$0xff] 0
        %224 = vst [vmem:[#allocation2 + $0x60] sm:$0xff] 0
        %225 = vst [vmem:[#allocation2 + $0x68] sm:$0xff] 0
        %226 = vst [vmem:[#allocation2 + $0x70] sm:$0xff] 0
        %227 = vst [vmem:[#allocation2 + $0x78] sm:$0xff] 0
        %v228 = vld [vmem:[%s207] sm:$0xff]
        %v229 = vld [vmem:[%s207 + $0x8] sm:$0xff]
        %v230 = vld [vmem:[%s207 + $0x10] sm:$0xff]
        %v231 = vld [vmem:[%s207 + $0x18] sm:$0xff]
        %v232 = vld [vmem:[%s207 + $0x20] sm:$0xff]
        %v233 = vld [vmem:[%s207 + $0x28] sm:$0xff]
        %v234 = vld [vmem:[%s207 + $0x30] sm:$0xff]
        %v235 = vld [vmem:[%s207 + $0x38] sm:$0xff]
        %v236 = vld [vmem:[%s207 + $0x40] sm:$0xff]
        %v237 = vld [vmem:[%s207 + $0x48] sm:$0xff]
        %v238 = vld [vmem:[%s207 + $0x50] sm:$0xff]
        %v239 = vld [vmem:[%s207 + $0x58] sm:$0xff]
        %v240 = vld [vmem:[%s207 + $0x60] sm:$0xff]
        %v241 = vld [vmem:[%s207 + $0x68] sm:$0xff]
        %v242 = vld [vmem:[%s207 + $0x70] sm:$0xff]
        %v243 = vld [vmem:[%s207 + $0x78] sm:$0xff]
        %v244 = vld [vmem:[%s207 + $0x80] sm:$0xff]
        %v245 = vld [vmem:[%s207 + $0x88] sm:$0xff]
        %v246 = vld [vmem:[%s207 + $0x90] sm:$0xff]
        %v247 = vld [vmem:[%s207 + $0x98] sm:$0xff]
        %v248 = vld [vmem:[%s207 + $0xa0] sm:$0xff]
        %v249 = vld [vmem:[%s207 + $0xa8] sm:$0xff]
        %v250 = vld [vmem:[%s207 + $0xb0] sm:$0xff]
        %v251 = vld [vmem:[%s207 + $0xb8] sm:$0xff]
        %v252 = vld [vmem:[%s207 + $0xc0] sm:$0xff]
        %v253 = vld [vmem:[%s207 + $0xc8] sm:$0xff]
        %v254 = vld [vmem:[%s207 + $0xd0] sm:$0xff]
        %v255 = vld [vmem:[%s207 + $0xd8] sm:$0xff]
        %v256 = vld [vmem:[%s207 + $0xe0] sm:$0xff]
        %v257 = vld [vmem:[%s207 + $0xe8] sm:$0xff]
        %v258 = vld [vmem:[%s207 + $0xf0] sm:$0xff]
        %v259 = vld [vmem:[%s207 + $0xf8] sm:$0xff]
        %v260 = vpack.c.bf16 %v229, %v228
        %v261 = vpack.c.bf16 %v231, %v230
        %v262 = vpack.c.bf16 %v233, %v232
        %v263 = vpack.c.bf16 %v235, %v234
        %v264 = vpack.c.bf16 %v237, %v236
        %v265 = vpack.c.bf16 %v239, %v238
        %v266 = vpack.c.bf16 %v241, %v240
        %v267 = vpack.c.bf16 %v243, %v242
        %v268 = vpack.c.bf16 %v245, %v244
        %v269 = vpack.c.bf16 %v247, %v246
        %v270 = vpack.c.bf16 %v249, %v248
        %v271 = vpack.c.bf16 %v251, %v250
        %v272 = vpack.c.bf16 %v253, %v252
        %v273 = vpack.c.bf16 %v255, %v254
        %v274 = vpack.c.bf16 %v257, %v256
        %v275 = vpack.c.bf16 %v259, %v258
        %vm276 = vcmask 195584
        %277 = vst.msk [vmem:[#allocation2] sm:$0xff] %vm276, %v260
        %278 = vst.msk [vmem:[#allocation2 + $0x8] sm:$0xff] %vm276, %v261
        %279 = vst.msk [vmem:[#allocation2 + $0x10] sm:$0xff] %vm276, %v262
        %280 = vst.msk [vmem:[#allocation2 + $0x18] sm:$0xff] %vm276, %v263
        %281 = vst.msk [vmem:[#allocation2 + $0x20] sm:$0xff] %vm276, %v264
        %282 = vst.msk [vmem:[#allocation2 + $0x28] sm:$0xff] %vm276, %v265
        %283 = vst.msk [vmem:[#allocation2 + $0x30] sm:$0xff] %vm276, %v266
        %284 = vst.msk [vmem:[#allocation2 + $0x38] sm:$0xff] %vm276, %v267
        %285 = vst.msk [vmem:[#allocation2 + $0x40] sm:$0xff] %vm276, %v268
        %286 = vst.msk [vmem:[#allocation2 + $0x48] sm:$0xff] %vm276, %v269
        %287 = vst.msk [vmem:[#allocation2 + $0x50] sm:$0xff] %vm276, %v270
        %288 = vst.msk [vmem:[#allocation2 + $0x58] sm:$0xff] %vm276, %v271
        %289 = vst.msk [vmem:[#allocation2 + $0x60] sm:$0xff] %vm276, %v272
        %290 = vst.msk [vmem:[#allocation2 + $0x68] sm:$0xff] %vm276, %v273
        %291 = vst.msk [vmem:[#allocation2 + $0x70] sm:$0xff] %vm276, %v274
        %292 = vst.msk [vmem:[#allocation2 + $0x78] sm:$0xff] %vm276, %v275
        %v293 = vld [vmem:[#allocation2] sm:$0xff]
        %v294 = vld [vmem:[#allocation2 + $0x8] sm:$0xff]
        %v295 = vld [vmem:[#allocation2 + $0x10] sm:$0xff]
        %v296 = vld [vmem:[#allocation2 + $0x18] sm:$0xff]
        %v297 = vld [vmem:[#allocation2 + $0x20] sm:$0xff]
        %v298 = vld [vmem:[#allocation2 + $0x28] sm:$0xff]
        %v299 = vld [vmem:[#allocation2 + $0x30] sm:$0xff]
        %v300 = vld [vmem:[#allocation2 + $0x38] sm:$0xff]
        %v301 = vld [vmem:[#allocation2 + $0x40] sm:$0xff]
        %v302 = vld [vmem:[#allocation2 + $0x48] sm:$0xff]
        %v303 = vld [vmem:[#allocation2 + $0x50] sm:$0xff]
        %v304 = vld [vmem:[#allocation2 + $0x58] sm:$0xff]
        %v305 = vld [vmem:[#allocation2 + $0x60] sm:$0xff]
        %v306 = vld [vmem:[#allocation2 + $0x68] sm:$0xff]
        %v307 = vld [vmem:[#allocation2 + $0x70] sm:$0xff]
        %v308 = vld [vmem:[#allocation2 + $0x78] sm:$0xff]
        %v309 = vld [vmem:[%s2] sm:$0xf]
        %v310 = vunpack.c.l.bf16 %v309
        %v311 = vld [vmem:[%s1] sm:$0xf]
        %v312 = vld [vmem:[%s1 + $0x4] sm:$0xf]
        %v313 = vld [vmem:[%s1 + $0x8] sm:$0xf]
        %v314 = vld [vmem:[%s1 + $0xc] sm:$0xf]
        %v315 = vld [vmem:[%s1 + $0x10] sm:$0xf]
        %v316 = vld [vmem:[%s1 + $0x14] sm:$0xf]
        %v317 = vld [vmem:[%s1 + $0x18] sm:$0xf]
        %v318 = vld [vmem:[%s1 + $0x1c] sm:$0xf]
        %v319 = vld [vmem:[%s1 + $0x20] sm:$0xf]
        %v320 = vld [vmem:[%s1 + $0x24] sm:$0xf]
        %v321 = vld [vmem:[%s1 + $0x28] sm:$0xf]
        %v322 = vld [vmem:[%s1 + $0x2c] sm:$0xf]
        %v323 = vld [vmem:[%s1 + $0x30] sm:$0xf]
        %v324 = vld [vmem:[%s1 + $0x34] sm:$0xf]
        %v325 = vld [vmem:[%s1 + $0x38] sm:$0xf]
        %v326 = vld [vmem:[%s1 + $0x3c] sm:$0xf]
        %v327 = vlaneseq
        %v328 = vshrl.u32 %v327, 7
        %v329 = vsub.s32 0, %v328
        %v330 = vrot.slane %v310, %v329
        %v347 = vunpack.c.l.b16 %v311
        %v348 = vunpack.c.l.b16 %v312
        %v349 = vunpack.c.l.b16 %v313
        %v350 = vunpack.c.l.b16 %v314
        %v351 = vunpack.c.l.b16 %v315
        %v352 = vunpack.c.l.b16 %v316
        %v353 = vunpack.c.l.b16 %v317
        %v354 = vunpack.c.l.b16 %v318
        %v355 = vunpack.c.l.b16 %v319
        %v356 = vunpack.c.l.b16 %v320
        %v357 = vunpack.c.l.b16 %v321
        %v358 = vunpack.c.l.b16 %v322
        %v359 = vunpack.c.l.b16 %v323
        %v360 = vunpack.c.l.b16 %v324
        %v361 = vunpack.c.l.b16 %v325
        %v362 = vunpack.c.l.b16 %v326
        %v363 = vpack.c.b16 %v348, %v347
        %v364 = vpack.c.b16 %v350, %v349
        %v365 = vpack.c.b16 %v352, %v351
        %v366 = vpack.c.b16 %v354, %v353
        %v367 = vpack.c.b16 %v356, %v355
        %v368 = vpack.c.b16 %v358, %v357
        %v369 = vpack.c.b16 %v360, %v359
        %v370 = vpack.c.b16 %v362, %v361
        %379 = vmatprep.subr.bf16.mxu0 0
        %380 = vmatpush1.bf16.msra.mxu0 %v363
        %381 = vmatprep.subr.bf16.mxu0 0
        %382 = vmatpush1.bf16.msra.mxu0 %v364
        %383 = vmatprep.subr.bf16.mxu0 0
        %384 = vmatpush1.bf16.msra.mxu0 %v365
        %385 = vmatprep.subr.bf16.mxu0 0
        %386 = vmatpush1.bf16.msra.mxu0 %v366
        %387 = vmatprep.subr.bf16.mxu0 0
        %388 = vmatpush1.bf16.msra.mxu0 %v367
        %389 = vmatprep.subr.bf16.mxu0 0
        %390 = vmatpush1.bf16.msra.mxu0 %v368
        %391 = vmatprep.subr.bf16.mxu0 0
        %392 = vmatpush1.bf16.msra.mxu0 %v369
        %393 = vmatprep.subr.bf16.mxu0 0
        %394 = vmatpush1.bf16.msra.mxu0 %v370
        %395 = vmatprep.subr.bf16.mxu0 0
        %396 = vmatpush1.bf16.msra.mxu0 0
        %397 = vmatprep.subr.bf16.mxu0 0
        %398 = vmatpush1.bf16.msra.mxu0 0
        %399 = vmatprep.subr.bf16.mxu0 0
        %400 = vmatpush1.bf16.msra.mxu0 0
        %401 = vmatprep.subr.bf16.mxu0 0
        %402 = vmatpush1.bf16.msra.mxu0 0
        %403 = vmatprep.subr.bf16.mxu0 0
        %404 = vmatpush1.bf16.msra.mxu0 0
        %405 = vmatprep.subr.bf16.mxu0 0
        %406 = vmatpush1.bf16.msra.mxu0 0
        %407 = vmatprep.subr.bf16.mxu0 0
        %408 = vmatpush1.bf16.msra.mxu0 0
        %409 = vmatprep.subr.bf16.mxu0 0
        %410 = vmatpush1.bf16.msra.mxu0 0
        %411 = vmatprep.mubr.bf16.mxu0 0
        %412 = vmatmul.mubr.bf16.gmra.mrb[0].mxu0 %v293
        %v413 = vpop.f32.mrb[0].mxu0
        %v414 = vadd.f32 %v330, %v413
        %v415 = vpop.f32.mrb[0].mxu0
        %v416 = vpop.f32.mrb[0].mxu0
        %v417 = vadd.f32 %v330, %v416
        %v418 = vpop.f32.mrb[0].mxu0
        %419 = vmatprep.mubr.bf16.mxu0 0
        %420 = vmatmul.mubr.bf16.gmra.mrb[0].mxu0 %v294
        %v421 = vpop.f32.mrb[0].mxu0
        %v422 = vadd.f32 %v330, %v421
        %v423 = vpop.f32.mrb[0].mxu0
        %v424 = vpop.f32.mrb[0].mxu0
        %v425 = vadd.f32 %v330, %v424
        %v426 = vpop.f32.mrb[0].mxu0
        %427 = vmatprep.mubr.bf16.mxu0 0
        %428 = vmatmul.mubr.bf16.gmra.mrb[0].mxu0 %v295
        %v429 = vpop.f32.mrb[0].mxu0
        %v430 = vadd.f32 %v330, %v429
        %v431 = vpop.f32.mrb[0].mxu0
        %v432 = vpop.f32.mrb[0].mxu0
        %v433 = vadd.f32 %v330, %v432
        %v434 = vpop.f32.mrb[0].mxu0
        %435 = vmatprep.mubr.bf16.mxu0 0
        %436 = vmatmul.mubr.bf16.gmra.mrb[0].mxu0 %v296
        %v437 = vpop.f32.mrb[0].mxu0
        %v438 = vadd.f32 %v330, %v437
        %v439 = vpop.f32.mrb[0].mxu0
        %v440 = vpop.f32.mrb[0].mxu0
        %v441 = vadd.f32 %v330, %v440
        %v442 = vpop.f32.mrb[0].mxu0
        %443 = vmatprep.mubr.bf16.mxu0 0
        %444 = vmatmul.mubr.bf16.gmra.mrb[0].mxu0 %v297
        %v445 = vpop.f32.mrb[0].mxu0
        %v446 = vadd.f32 %v330, %v445
        %v447 = vpop.f32.mrb[0].mxu0
        %v448 = vpop.f32.mrb[0].mxu0
        %v449 = vadd.f32 %v330, %v448
        %v450 = vpop.f32.mrb[0].mxu0
        %451 = vmatprep.mubr.bf16.mxu0 0
        %452 = vmatmul.mubr.bf16.gmra.mrb[0].mxu0 %v298
        %v453 = vpop.f32.mrb[0].mxu0
        %v454 = vadd.f32 %v330, %v453
        %v455 = vpop.f32.mrb[0].mxu0
        %v456 = vpop.f32.mrb[0].mxu0
        %v457 = vadd.f32 %v330, %v456
        %v458 = vpop.f32.mrb[0].mxu0
        %459 = vmatprep.mubr.bf16.mxu0 0
        %460 = vmatmul.mubr.bf16.gmra.mrb[0].mxu0 %v299
        %v461 = vpop.f32.mrb[0].mxu0
        %v462 = vadd.f32 %v330, %v461
        %v463 = vpop.f32.mrb[0].mxu0
        %v464 = vpop.f32.mrb[0].mxu0
        %v465 = vadd.f32 %v330, %v464
        %v466 = vpop.f32.mrb[0].mxu0
        %467 = vmatprep.mubr.bf16.mxu0 0
        %468 = vmatmul.mubr.bf16.gmra.mrb[0].mxu0 %v300
        %v469 = vpop.f32.mrb[0].mxu0
        %v470 = vadd.f32 %v330, %v469
        %v471 = vpop.f32.mrb[0].mxu0
        %v472 = vpop.f32.mrb[0].mxu0
        %v473 = vadd.f32 %v330, %v472
        %v474 = vpop.f32.mrb[0].mxu0
        %475 = vmatprep.mubr.bf16.mxu0 0
        %476 = vmatmul.mubr.bf16.gmra.mrb[0].mxu0 %v301
        %v477 = vpop.f32.mrb[0].mxu0
        %v478 = vadd.f32 %v330, %v477
        %v479 = vpop.f32.mrb[0].mxu0
        %v480 = vpop.f32.mrb[0].mxu0
        %v481 = vadd.f32 %v330, %v480
        %v482 = vpop.f32.mrb[0].mxu0
        %483 = vmatprep.mubr.bf16.mxu0 0
        %484 = vmatmul.mubr.bf16.gmra.mrb[0].mxu0 %v302
        %v485 = vpop.f32.mrb[0].mxu0
        %v486 = vadd.f32 %v330, %v485
        %v487 = vpop.f32.mrb[0].mxu0
        %v488 = vpop.f32.mrb[0].mxu0
        %v489 = vadd.f32 %v330, %v488
        %v490 = vpop.f32.mrb[0].mxu0
        %491 = vmatprep.mubr.bf16.mxu0 0
        %492 = vmatmul.mubr.bf16.gmra.mrb[0].mxu0 %v303
        %v493 = vpop.f32.mrb[0].mxu0
        %v494 = vadd.f32 %v330, %v493
        %v495 = vpop.f32.mrb[0].mxu0
        %v496 = vpop.f32.mrb[0].mxu0
        %v497 = vadd.f32 %v330, %v496
        %v498 = vpop.f32.mrb[0].mxu0
        %499 = vmatprep.mubr.bf16.mxu0 0
        %500 = vmatmul.mubr.bf16.gmra.mrb[0].mxu0 %v304
        %v501 = vpop.f32.mrb[0].mxu0
        %v502 = vadd.f32 %v330, %v501
        %v503 = vpop.f32.mrb[0].mxu0
        %v504 = vpop.f32.mrb[0].mxu0
        %v505 = vadd.f32 %v330, %v504
        %v506 = vpop.f32.mrb[0].mxu0
        %507 = vmatprep.mubr.bf16.mxu0 0
        %508 = vmatmul.mubr.bf16.gmra.mrb[0].mxu0 %v305
        %v509 = vpop.f32.mrb[0].mxu0
        %v510 = vadd.f32 %v330, %v509
        %v511 = vpop.f32.mrb[0].mxu0
        %v512 = vpop.f32.mrb[0].mxu0
        %v513 = vadd.f32 %v330, %v512
        %v514 = vpop.f32.mrb[0].mxu0
        %515 = vmatprep.mubr.bf16.mxu0 0
        %516 = vmatmul.mubr.bf16.gmra.mrb[0].mxu0 %v306
        %v517 = vpop.f32.mrb[0].mxu0
        %v518 = vadd.f32 %v330, %v517
        %v519 = vpop.f32.mrb[0].mxu0
        %v520 = vpop.f32.mrb[0].mxu0
        %v521 = vadd.f32 %v330, %v520
        %v522 = vpop.f32.mrb[0].mxu0
        %523 = vmatprep.mubr.bf16.mxu0 0
        %524 = vmatmul.mubr.bf16.gmra.mrb[0].mxu0 %v307
        %v525 = vpop.f32.mrb[0].mxu0
        %v526 = vadd.f32 %v330, %v525
        %v527 = vpop.f32.mrb[0].mxu0
        %v528 = vpop.f32.mrb[0].mxu0
        %v529 = vadd.f32 %v330, %v528
        %v530 = vpop.f32.mrb[0].mxu0
        %531 = vmatprep.mubr.bf16.mxu0 0
        %532 = vmatmul.mubr.bf16.gmra.mrb[0].mxu0 %v308
        %v533 = vpop.f32.mrb[0].mxu0
        %v534 = vadd.f32 %v330, %v533
        %v535 = vpop.f32.mrb[0].mxu0
        %v536 = vpop.f32.mrb[0].mxu0
        %v537 = vadd.f32 %v330, %v536
        %v538 = vpop.f32.mrb[0].mxu0
        %539 = vdwg.mxu0
        %v540 = vmax.f32 %v414, 0.0
        %v541 = vmax.f32 %v417, 0.0
        %v542 = vmax.f32 %v422, 0.0
        %v543 = vmax.f32 %v425, 0.0
        %v544 = vmax.f32 %v430, 0.0
        %v545 = vmax.f32 %v433, 0.0
        %v546 = vmax.f32 %v438, 0.0
        %v547 = vmax.f32 %v441, 0.0
        %v548 = vmax.f32 %v446, 0.0
        %v549 = vmax.f32 %v449, 0.0
        %v550 = vmax.f32 %v454, 0.0
        %v551 = vmax.f32 %v457, 0.0
        %v552 = vmax.f32 %v462, 0.0
        %v553 = vmax.f32 %v465, 0.0
        %v554 = vmax.f32 %v470, 0.0
        %v555 = vmax.f32 %v473, 0.0
        %v556 = vmax.f32 %v478, 0.0
        %v557 = vmax.f32 %v481, 0.0
        %v558 = vmax.f32 %v486, 0.0
        %v559 = vmax.f32 %v489, 0.0
        %v560 = vmax.f32 %v494, 0.0
        %v561 = vmax.f32 %v497, 0.0
        %v562 = vmax.f32 %v502, 0.0
        %v563 = vmax.f32 %v505, 0.0
        %v564 = vmax.f32 %v510, 0.0
        %v565 = vmax.f32 %v513, 0.0
        %v566 = vmax.f32 %v518, 0.0
        %v567 = vmax.f32 %v521, 0.0
        %v568 = vmax.f32 %v526, 0.0
        %v569 = vmax.f32 %v529, 0.0
        %v570 = vmax.f32 %v534, 0.0
        %v571 = vmax.f32 %v537, 0.0
        %v572 = vpack.c.bf16 %v541, %v540
        %v573 = vpack.c.bf16 %v543, %v542
        %v574 = vpack.c.bf16 %v545, %v544
        %v575 = vpack.c.bf16 %v547, %v546
        %v576 = vpack.c.bf16 %v549, %v548
        %v577 = vpack.c.bf16 %v551, %v550
        %v578 = vpack.c.bf16 %v553, %v552
        %v579 = vpack.c.bf16 %v555, %v554
        %v580 = vpack.c.bf16 %v557, %v556
        %v581 = vpack.c.bf16 %v559, %v558
        %v582 = vpack.c.bf16 %v561, %v560
        %v583 = vpack.c.bf16 %v563, %v562
        %v584 = vpack.c.bf16 %v565, %v564
        %v585 = vpack.c.bf16 %v567, %v566
        %v586 = vpack.c.bf16 %v569, %v568
        %v587 = vpack.c.bf16 %v571, %v570
        %s588 = scalar_lea.vmem %s1, 64
        %v589 = vld [vmem:[%s588] sm:$0xf]
        %v590 = vld [vmem:[%s588 + $0x4] sm:$0xf]
        %v591 = vld [vmem:[%s588 + $0x8] sm:$0xf]
        %v592 = vld [vmem:[%s588 + $0xc] sm:$0xf]
        %v593 = vld [vmem:[%s588 + $0x10] sm:$0xf]
        %v594 = vld [vmem:[%s588 + $0x14] sm:$0xf]
        %v595 = vld [vmem:[%s588 + $0x18] sm:$0xf]
        %v596 = vld [vmem:[%s588 + $0x1c] sm:$0xf]
        %v597 = vld [vmem:[%s588 + $0x20] sm:$0xf]
        %v598 = vld [vmem:[%s588 + $0x24] sm:$0xf]
        %v599 = vld [vmem:[%s588 + $0x28] sm:$0xf]
        %v600 = vld [vmem:[%s588 + $0x2c] sm:$0xf]
        %v601 = vld [vmem:[%s588 + $0x30] sm:$0xf]
        %v602 = vld [vmem:[%s588 + $0x34] sm:$0xf]
        %v603 = vld [vmem:[%s588 + $0x38] sm:$0xf]
        %v604 = vld [vmem:[%s588 + $0x3c] sm:$0xf]
        %v605 = vlaneseq
        %v606 = vshrl.u32 %v605, 7
        %v607 = vsub.s32 1, %v606
        %v608 = vrot.slane %v310, %v607
        %v625 = vunpack.c.l.b16 %v589
        %v626 = vunpack.c.l.b16 %v590
        %v627 = vunpack.c.l.b16 %v591
        %v628 = vunpack.c.l.b16 %v592
        %v629 = vunpack.c.l.b16 %v593
        %v630 = vunpack.c.l.b16 %v594
        %v631 = vunpack.c.l.b16 %v595
        %v632 = vunpack.c.l.b16 %v596
        %v633 = vunpack.c.l.b16 %v597
        %v634 = vunpack.c.l.b16 %v598
        %v635 = vunpack.c.l.b16 %v599
        %v636 = vunpack.c.l.b16 %v600
        %v637 = vunpack.c.l.b16 %v601
        %v638 = vunpack.c.l.b16 %v602
        %v639 = vunpack.c.l.b16 %v603
        %v640 = vunpack.c.l.b16 %v604
        %v641 = vpack.c.b16 %v626, %v625
        %v642 = vpack.c.b16 %v628, %v627
        %v643 = vpack.c.b16 %v630, %v629
        %v644 = vpack.c.b16 %v632, %v631
        %v645 = vpack.c.b16 %v634, %v633
        %v646 = vpack.c.b16 %v636, %v635
        %v647 = vpack.c.b16 %v638, %v637
        %v648 = vpack.c.b16 %v640, %v639
        %657 = vmatprep.subr.bf16.mxu0 0
        %658 = vmatpush1.bf16.msra.mxu0 %v641
        %659 = vmatprep.subr.bf16.mxu0 0
        %660 = vmatpush1.bf16.msra.mxu0 %v642
        %661 = vmatprep.subr.bf16.mxu0 0
        %662 = vmatpush1.bf16.msra.mxu0 %v643
        %663 = vmatprep.subr.bf16.mxu0 0
        %664 = vmatpush1.bf16.msra.mxu0 %v644
        %665 = vmatprep.subr.bf16.mxu0 0
        %666 = vmatpush1.bf16.msra.mxu0 %v645
        %667 = vmatprep.subr.bf16.mxu0 0
        %668 = vmatpush1.bf16.msra.mxu0 %v646
        %669 = vmatprep.subr.bf16.mxu0 0
        %670 = vmatpush1.bf16.msra.mxu0 %v647
        %671 = vmatprep.subr.bf16.mxu0 0
        %672 = vmatpush1.bf16.msra.mxu0 %v648
        %673 = vmatprep.subr.bf16.mxu0 0
        %674 = vmatpush1.bf16.msra.mxu0 0
        %675 = vmatprep.subr.bf16.mxu0 0
        %676 = vmatpush1.bf16.msra.mxu0 0
        %677 = vmatprep.subr.bf16.mxu0 0
        %678 = vmatpush1.bf16.msra.mxu0 0
        %679 = vmatprep.subr.bf16.mxu0 0
        %680 = vmatpush1.bf16.msra.mxu0 0
        %681 = vmatprep.subr.bf16.mxu0 0
        %682 = vmatpush1.bf16.msra.mxu0 0
        %683 = vmatprep.subr.bf16.mxu0 0
        %684 = vmatpush1.bf16.msra.mxu0 0
        %685 = vmatprep.subr.bf16.mxu0 0
        %686 = vmatpush1.bf16.msra.mxu0 0
        %687 = vmatprep.subr.bf16.mxu0 0
        %688 = vmatpush1.bf16.msra.mxu0 0
        %689 = vmatprep.mubr.bf16.mxu0 0
        %690 = vmatmul.mubr.bf16.gmra.mrb[0].mxu0 %v572
        %v691 = vpop.f32.mrb[0].mxu0
        %v692 = vadd.f32 %v608, %v691
        %v693 = vpop.f32.mrb[0].mxu0
        %v694 = vpop.f32.mrb[0].mxu0
        %v695 = vadd.f32 %v608, %v694
        %v696 = vpop.f32.mrb[0].mxu0
        %697 = vmatprep.mubr.bf16.mxu0 0
        %698 = vmatmul.mubr.bf16.gmra.mrb[0].mxu0 %v573
        %v699 = vpop.f32.mrb[0].mxu0
        %v700 = vadd.f32 %v608, %v699
        %v701 = vpop.f32.mrb[0].mxu0
        %v702 = vpop.f32.mrb[0].mxu0
        %v703 = vadd.f32 %v608, %v702
        %v704 = vpop.f32.mrb[0].mxu0
        %705 = vmatprep.mubr.bf16.mxu0 0
        %706 = vmatmul.mubr.bf16.gmra.mrb[0].mxu0 %v574
        %v707 = vpop.f32.mrb[0].mxu0
        %v708 = vadd.f32 %v608, %v707
        %v709 = vpop.f32.mrb[0].mxu0
        %v710 = vpop.f32.mrb[0].mxu0
        %v711 = vadd.f32 %v608, %v710
        %v712 = vpop.f32.mrb[0].mxu0
        %713 = vmatprep.mubr.bf16.mxu0 0
        %714 = vmatmul.mubr.bf16.gmra.mrb[0].mxu0 %v575
        %v715 = vpop.f32.mrb[0].mxu0
        %v716 = vadd.f32 %v608, %v715
        %v717 = vpop.f32.mrb[0].mxu0
        %v718 = vpop.f32.mrb[0].mxu0
        %v719 = vadd.f32 %v608, %v718
        %v720 = vpop.f32.mrb[0].mxu0
        %721 = vmatprep.mubr.bf16.mxu0 0
        %722 = vmatmul.mubr.bf16.gmra.mrb[0].mxu0 %v576
        %v723 = vpop.f32.mrb[0].mxu0
        %v724 = vadd.f32 %v608, %v723
        %v725 = vpop.f32.mrb[0].mxu0
        %v726 = vpop.f32.mrb[0].mxu0
        %v727 = vadd.f32 %v608, %v726
        %v728 = vpop.f32.mrb[0].mxu0
        %729 = vmatprep.mubr.bf16.mxu0 0
        %730 = vmatmul.mubr.bf16.gmra.mrb[0].mxu0 %v577
        %v731 = vpop.f32.mrb[0].mxu0
        %v732 = vadd.f32 %v608, %v731
        %v733 = vpop.f32.mrb[0].mxu0
        %v734 = vpop.f32.mrb[0].mxu0
        %v735 = vadd.f32 %v608, %v734
        %v736 = vpop.f32.mrb[0].mxu0
        %737 = vmatprep.mubr.bf16.mxu0 0
        %738 = vmatmul.mubr.bf16.gmra.mrb[0].mxu0 %v578
        %v739 = vpop.f32.mrb[0].mxu0
        %v740 = vadd.f32 %v608, %v739
        %v741 = vpop.f32.mrb[0].mxu0
        %v742 = vpop.f32.mrb[0].mxu0
        %v743 = vadd.f32 %v608, %v742
        %v744 = vpop.f32.mrb[0].mxu0
        %745 = vmatprep.mubr.bf16.mxu0 0
        %746 = vmatmul.mubr.bf16.gmra.mrb[0].mxu0 %v579
        %v747 = vpop.f32.mrb[0].mxu0
        %v748 = vadd.f32 %v608, %v747
        %v749 = vpop.f32.mrb[0].mxu0
        %v750 = vpop.f32.mrb[0].mxu0
        %v751 = vadd.f32 %v608, %v750
        %v752 = vpop.f32.mrb[0].mxu0
        %753 = vmatprep.mubr.bf16.mxu0 0
        %754 = vmatmul.mubr.bf16.gmra.mrb[0].mxu0 %v580
        %v755 = vpop.f32.mrb[0].mxu0
        %v756 = vadd.f32 %v608, %v755
        %v757 = vpop.f32.mrb[0].mxu0
        %v758 = vpop.f32.mrb[0].mxu0
        %v759 = vadd.f32 %v608, %v758
        %v760 = vpop.f32.mrb[0].mxu0
        %761 = vmatprep.mubr.bf16.mxu0 0
        %762 = vmatmul.mubr.bf16.gmra.mrb[0].mxu0 %v581
        %v763 = vpop.f32.mrb[0].mxu0
        %v764 = vadd.f32 %v608, %v763
        %v765 = vpop.f32.mrb[0].mxu0
        %v766 = vpop.f32.mrb[0].mxu0
        %v767 = vadd.f32 %v608, %v766
        %v768 = vpop.f32.mrb[0].mxu0
        %769 = vmatprep.mubr.bf16.mxu0 0
        %770 = vmatmul.mubr.bf16.gmra.mrb[0].mxu0 %v582
        %v771 = vpop.f32.mrb[0].mxu0
        %v772 = vadd.f32 %v608, %v771
        %v773 = vpop.f32.mrb[0].mxu0
        %v774 = vpop.f32.mrb[0].mxu0
        %v775 = vadd.f32 %v608, %v774
        %v776 = vpop.f32.mrb[0].mxu0
        %777 = vmatprep.mubr.bf16.mxu0 0
        %778 = vmatmul.mubr.bf16.gmra.mrb[0].mxu0 %v583
        %v779 = vpop.f32.mrb[0].mxu0
        %v780 = vadd.f32 %v608, %v779
        %v781 = vpop.f32.mrb[0].mxu0
        %v782 = vpop.f32.mrb[0].mxu0
        %v783 = vadd.f32 %v608, %v782
        %v784 = vpop.f32.mrb[0].mxu0
        %785 = vmatprep.mubr.bf16.mxu0 0
        %786 = vmatmul.mubr.bf16.gmra.mrb[0].mxu0 %v584
        %v787 = vpop.f32.mrb[0].mxu0
        %v788 = vadd.f32 %v608, %v787
        %v789 = vpop.f32.mrb[0].mxu0
        %v790 = vpop.f32.mrb[0].mxu0
        %v791 = vadd.f32 %v608, %v790
        %v792 = vpop.f32.mrb[0].mxu0
        %793 = vmatprep.mubr.bf16.mxu0 0
        %794 = vmatmul.mubr.bf16.gmra.mrb[0].mxu0 %v585
        %v795 = vpop.f32.mrb[0].mxu0
        %v796 = vadd.f32 %v608, %v795
        %v797 = vpop.f32.mrb[0].mxu0
        %v798 = vpop.f32.mrb[0].mxu0
        %v799 = vadd.f32 %v608, %v798
        %v800 = vpop.f32.mrb[0].mxu0
        %801 = vmatprep.mubr.bf16.mxu0 0
        %802 = vmatmul.mubr.bf16.gmra.mrb[0].mxu0 %v586
        %v803 = vpop.f32.mrb[0].mxu0
        %v804 = vadd.f32 %v608, %v803
        %v805 = vpop.f32.mrb[0].mxu0
        %v806 = vpop.f32.mrb[0].mxu0
        %v807 = vadd.f32 %v608, %v806
        %v808 = vpop.f32.mrb[0].mxu0
        %809 = vmatprep.mubr.bf16.mxu0 0
        %810 = vmatmul.mubr.bf16.gmra.mrb[0].mxu0 %v587
        %v811 = vpop.f32.mrb[0].mxu0
        %v812 = vadd.f32 %v608, %v811
        %v813 = vpop.f32.mrb[0].mxu0
        %v814 = vpop.f32.mrb[0].mxu0
        %v815 = vadd.f32 %v608, %v814
        %v816 = vpop.f32.mrb[0].mxu0
        %817 = vdwg.mxu0
        %v818 = vmax.f32 %v692, 0.0
        %v819 = vmax.f32 %v695, 0.0
        %v820 = vmax.f32 %v700, 0.0
        %v821 = vmax.f32 %v703, 0.0
        %v822 = vmax.f32 %v708, 0.0
        %v823 = vmax.f32 %v711, 0.0
        %v824 = vmax.f32 %v716, 0.0
        %v825 = vmax.f32 %v719, 0.0
        %v826 = vmax.f32 %v724, 0.0
        %v827 = vmax.f32 %v727, 0.0
        %v828 = vmax.f32 %v732, 0.0
        %v829 = vmax.f32 %v735, 0.0
        %v830 = vmax.f32 %v740, 0.0
        %v831 = vmax.f32 %v743, 0.0
        %v832 = vmax.f32 %v748, 0.0
        %v833 = vmax.f32 %v751, 0.0
        %v834 = vmax.f32 %v756, 0.0
        %v835 = vmax.f32 %v759, 0.0
        %v836 = vmax.f32 %v764, 0.0
        %v837 = vmax.f32 %v767, 0.0
        %v838 = vmax.f32 %v772, 0.0
        %v839 = vmax.f32 %v775, 0.0
        %v840 = vmax.f32 %v780, 0.0
        %v841 = vmax.f32 %v783, 0.0
        %v842 = vmax.f32 %v788, 0.0
        %v843 = vmax.f32 %v791, 0.0
        %v844 = vmax.f32 %v796, 0.0
        %v845 = vmax.f32 %v799, 0.0
        %v846 = vmax.f32 %v804, 0.0
        %v847 = vmax.f32 %v807, 0.0
        %v848 = vmax.f32 %v812, 0.0
        %v849 = vmax.f32 %v815, 0.0
        %v850 = vpack.c.bf16 %v819, %v818
        %v851 = vpack.c.bf16 %v821, %v820
        %v852 = vpack.c.bf16 %v823, %v822
        %v853 = vpack.c.bf16 %v825, %v824
        %v854 = vpack.c.bf16 %v827, %v826
        %v855 = vpack.c.bf16 %v829, %v828
        %v856 = vpack.c.bf16 %v831, %v830
        %v857 = vpack.c.bf16 %v833, %v832
        %v858 = vpack.c.bf16 %v835, %v834
        %v859 = vpack.c.bf16 %v837, %v836
        %v860 = vpack.c.bf16 %v839, %v838
        %v861 = vpack.c.bf16 %v841, %v840
        %v862 = vpack.c.bf16 %v843, %v842
        %v863 = vpack.c.bf16 %v845, %v844
        %v864 = vpack.c.bf16 %v847, %v846
        %v865 = vpack.c.bf16 %v849, %v848
        %s866 = scalar_lea.vmem %s1, 128
        %v867 = vld [vmem:[%s866] sm:$0xf]
        %v868 = vld [vmem:[%s866 + $0x4] sm:$0xf]
        %v869 = vld [vmem:[%s866 + $0x8] sm:$0xf]
        %v870 = vld [vmem:[%s866 + $0xc] sm:$0xf]
        %v871 = vld [vmem:[%s866 + $0x10] sm:$0xf]
        %v872 = vld [vmem:[%s866 + $0x14] sm:$0xf]
        %v873 = vld [vmem:[%s866 + $0x18] sm:$0xf]
        %v874 = vld [vmem:[%s866 + $0x1c] sm:$0xf]
        %v875 = vld [vmem:[%s866 + $0x20] sm:$0xf]
        %v876 = vld [vmem:[%s866 + $0x24] sm:$0xf]
        %v877 = vld [vmem:[%s866 + $0x28] sm:$0xf]
        %v878 = vld [vmem:[%s866 + $0x2c] sm:$0xf]
        %v879 = vld [vmem:[%s866 + $0x30] sm:$0xf]
        %v880 = vld [vmem:[%s866 + $0x34] sm:$0xf]
        %v881 = vld [vmem:[%s866 + $0x38] sm:$0xf]
        %v882 = vld [vmem:[%s866 + $0x3c] sm:$0xf]
        %v883 = vlaneseq
        %v884 = vshrl.u32 %v883, 7
        %v885 = vsub.s32 2, %v884
        %v886 = vrot.slane %v310, %v885
        %v903 = vunpack.c.l.b16 %v867
        %v904 = vunpack.c.l.b16 %v868
        %v905 = vunpack.c.l.b16 %v869
        %v906 = vunpack.c.l.b16 %v870
        %v907 = vunpack.c.l.b16 %v871
        %v908 = vunpack.c.l.b16 %v872
        %v909 = vunpack.c.l.b16 %v873
        %v910 = vunpack.c.l.b16 %v874
        %v911 = vunpack.c.l.b16 %v875
        %v912 = vunpack.c.l.b16 %v876
        %v913 = vunpack.c.l.b16 %v877
        %v914 = vunpack.c.l.b16 %v878
        %v915 = vunpack.c.l.b16 %v879
        %v916 = vunpack.c.l.b16 %v880
        %v917 = vunpack.c.l.b16 %v881
        %v918 = vunpack.c.l.b16 %v882
        %v919 = vpack.c.b16 %v904, %v903
        %v920 = vpack.c.b16 %v906, %v905
        %v921 = vpack.c.b16 %v908, %v907
        %v922 = vpack.c.b16 %v910, %v909
        %v923 = vpack.c.b16 %v912, %v911
        %v924 = vpack.c.b16 %v914, %v913
        %v925 = vpack.c.b16 %v916, %v915
        %v926 = vpack.c.b16 %v918, %v917
        %935 = vmatprep.subr.bf16.mxu0 0
        %936 = vmatpush1.bf16.msra.mxu0 %v919
        %937 = vmatprep.subr.bf16.mxu0 0
        %938 = vmatpush1.bf16.msra.mxu0 %v920
        %939 = vmatprep.subr.bf16.mxu0 0
        %940 = vmatpush1.bf16.msra.mxu0 %v921
        %941 = vmatprep.subr.bf16.mxu0 0
        %942 = vmatpush1.bf16.msra.mxu0 %v922
        %943 = vmatprep.subr.bf16.mxu0 0
        %944 = vmatpush1.bf16.msra.mxu0 %v923
        %945 = vmatprep.subr.bf16.mxu0 0
        %946 = vmatpush1.bf16.msra.mxu0 %v924
        %947 = vmatprep.subr.bf16.mxu0 0
        %948 = vmatpush1.bf16.msra.mxu0 %v925
        %949 = vmatprep.subr.bf16.mxu0 0
        %950 = vmatpush1.bf16.msra.mxu0 %v926
        %951 = vmatprep.subr.bf16.mxu0 0
        %952 = vmatpush1.bf16.msra.mxu0 0
        %953 = vmatprep.subr.bf16.mxu0 0
        %954 = vmatpush1.bf16.msra.mxu0 0
        %955 = vmatprep.subr.bf16.mxu0 0
        %956 = vmatpush1.bf16.msra.mxu0 0
        %957 = vmatprep.subr.bf16.mxu0 0
        %958 = vmatpush1.bf16.msra.mxu0 0
        %959 = vmatprep.subr.bf16.mxu0 0
        %960 = vmatpush1.bf16.msra.mxu0 0
        %961 = vmatprep.subr.bf16.mxu0 0
        %962 = vmatpush1.bf16.msra.mxu0 0
        %963 = vmatprep.subr.bf16.mxu0 0
        %964 = vmatpush1.bf16.msra.mxu0 0
        %965 = vmatprep.subr.bf16.mxu0 0
        %966 = vmatpush1.bf16.msra.mxu0 0
        %967 = vmatprep.mubr.bf16.mxu0 0
        %968 = vmatmul.mubr.bf16.gmra.mrb[0].mxu0 %v850
        %v969 = vpop.f32.mrb[0].mxu0
        %v970 = vadd.f32 %v886, %v969
        %v971 = vpop.f32.mrb[0].mxu0
        %v972 = vpop.f32.mrb[0].mxu0
        %v973 = vadd.f32 %v886, %v972
        %v974 = vpop.f32.mrb[0].mxu0
        %975 = vmatprep.mubr.bf16.mxu0 0
        %976 = vmatmul.mubr.bf16.gmra.mrb[0].mxu0 %v851
        %v977 = vpop.f32.mrb[0].mxu0
        %v978 = vadd.f32 %v886, %v977
        %v979 = vpop.f32.mrb[0].mxu0
        %v980 = vpop.f32.mrb[0].mxu0
        %v981 = vadd.f32 %v886, %v980
        %v982 = vpop.f32.mrb[0].mxu0
        %983 = vmatprep.mubr.bf16.mxu0 0
        %984 = vmatmul.mubr.bf16.gmra.mrb[0].mxu0 %v852
        %v985 = vpop.f32.mrb[0].mxu0
        %v986 = vadd.f32 %v886, %v985
        %v987 = vpop.f32.mrb[0].mxu0
        %v988 = vpop.f32.mrb[0].mxu0
        %v989 = vadd.f32 %v886, %v988
        %v990 = vpop.f32.mrb[0].mxu0
        %991 = vmatprep.mubr.bf16.mxu0 0
        %992 = vmatmul.mubr.bf16.gmra.mrb[0].mxu0 %v853
        %v993 = vpop.f32.mrb[0].mxu0
        %v994 = vadd.f32 %v886, %v993
        %v995 = vpop.f32.mrb[0].mxu0
        %v996 = vpop.f32.mrb[0].mxu0
        %v997 = vadd.f32 %v886, %v996
        %v998 = vpop.f32.mrb[0].mxu0
        %999 = vmatprep.mubr.bf16.mxu0 0
        %1000 = vmatmul.mubr.bf16.gmra.mrb[0].mxu0 %v854
        %v1001 = vpop.f32.mrb[0].mxu0
        %v1002 = vadd.f32 %v886, %v1001
        %v1003 = vpop.f32.mrb[0].mxu0
        %v1004 = vpop.f32.mrb[0].mxu0
        %v1005 = vadd.f32 %v886, %v1004
        %v1006 = vpop.f32.mrb[0].mxu0
        %1007 = vmatprep.mubr.bf16.mxu0 0
        %1008 = vmatmul.mubr.bf16.gmra.mrb[0].mxu0 %v855
        %v1009 = vpop.f32.mrb[0].mxu0
        %v1010 = vadd.f32 %v886, %v1009
        %v1011 = vpop.f32.mrb[0].mxu0
        %v1012 = vpop.f32.mrb[0].mxu0
        %v1013 = vadd.f32 %v886, %v1012
        %v1014 = vpop.f32.mrb[0].mxu0
        %1015 = vmatprep.mubr.bf16.mxu0 0
        %1016 = vmatmul.mubr.bf16.gmra.mrb[0].mxu0 %v856
        %v1017 = vpop.f32.mrb[0].mxu0
        %v1018 = vadd.f32 %v886, %v1017
        %v1019 = vpop.f32.mrb[0].mxu0
        %v1020 = vpop.f32.mrb[0].mxu0
        %v1021 = vadd.f32 %v886, %v1020
        %v1022 = vpop.f32.mrb[0].mxu0
        %1023 = vmatprep.mubr.bf16.mxu0 0
        %1024 = vmatmul.mubr.bf16.gmra.mrb[0].mxu0 %v857
        %v1025 = vpop.f32.mrb[0].mxu0
        %v1026 = vadd.f32 %v886, %v1025
        %v1027 = vpop.f32.mrb[0].mxu0
        %v1028 = vpop.f32.mrb[0].mxu0
        %v1029 = vadd.f32 %v886, %v1028
        %v1030 = vpop.f32.mrb[0].mxu0
        %1031 = vmatprep.mubr.bf16.mxu0 0
        %1032 = vmatmul.mubr.bf16.gmra.mrb[0].mxu0 %v858
        %v1033 = vpop.f32.mrb[0].mxu0
        %v1034 = vadd.f32 %v886, %v1033
        %v1035 = vpop.f32.mrb[0].mxu0
        %v1036 = vpop.f32.mrb[0].mxu0
        %v1037 = vadd.f32 %v886, %v1036
        %v1038 = vpop.f32.mrb[0].mxu0
        %1039 = vmatprep.mubr.bf16.mxu0 0
        %1040 = vmatmul.mubr.bf16.gmra.mrb[0].mxu0 %v859
        %v1041 = vpop.f32.mrb[0].mxu0
        %v1042 = vadd.f32 %v886, %v1041
        %v1043 = vpop.f32.mrb[0].mxu0
        %v1044 = vpop.f32.mrb[0].mxu0
        %v1045 = vadd.f32 %v886, %v1044
        %v1046 = vpop.f32.mrb[0].mxu0
        %1047 = vmatprep.mubr.bf16.mxu0 0
        %1048 = vmatmul.mubr.bf16.gmra.mrb[0].mxu0 %v860
        %v1049 = vpop.f32.mrb[0].mxu0
        %v1050 = vadd.f32 %v886, %v1049
        %v1051 = vpop.f32.mrb[0].mxu0
        %v1052 = vpop.f32.mrb[0].mxu0
        %v1053 = vadd.f32 %v886, %v1052
        %v1054 = vpop.f32.mrb[0].mxu0
        %1055 = vmatprep.mubr.bf16.mxu0 0
        %1056 = vmatmul.mubr.bf16.gmra.mrb[0].mxu0 %v861
        %v1057 = vpop.f32.mrb[0].mxu0
        %v1058 = vadd.f32 %v886, %v1057
        %v1059 = vpop.f32.mrb[0].mxu0
        %v1060 = vpop.f32.mrb[0].mxu0
        %v1061 = vadd.f32 %v886, %v1060
        %v1062 = vpop.f32.mrb[0].mxu0
        %1063 = vmatprep.mubr.bf16.mxu0 0
        %1064 = vmatmul.mubr.bf16.gmra.mrb[0].mxu0 %v862
        %v1065 = vpop.f32.mrb[0].mxu0
        %v1066 = vadd.f32 %v886, %v1065
        %v1067 = vpop.f32.mrb[0].mxu0
        %v1068 = vpop.f32.mrb[0].mxu0
        %v1069 = vadd.f32 %v886, %v1068
        %v1070 = vpop.f32.mrb[0].mxu0
        %1071 = vmatprep.mubr.bf16.mxu0 0
        %1072 = vmatmul.mubr.bf16.gmra.mrb[0].mxu0 %v863
        %v1073 = vpop.f32.mrb[0].mxu0
        %v1074 = vadd.f32 %v886, %v1073
        %v1075 = vpop.f32.mrb[0].mxu0
        %v1076 = vpop.f32.mrb[0].mxu0
        %v1077 = vadd.f32 %v886, %v1076
        %v1078 = vpop.f32.mrb[0].mxu0
        %1079 = vmatprep.mubr.bf16.mxu0 0
        %1080 = vmatmul.mubr.bf16.gmra.mrb[0].mxu0 %v864
        %v1081 = vpop.f32.mrb[0].mxu0
        %v1082 = vadd.f32 %v886, %v1081
        %v1083 = vpop.f32.mrb[0].mxu0
        %v1084 = vpop.f32.mrb[0].mxu0
        %v1085 = vadd.f32 %v886, %v1084
        %v1086 = vpop.f32.mrb[0].mxu0
        %1087 = vmatprep.mubr.bf16.mxu0 0
        %1088 = vmatmul.mubr.bf16.gmra.mrb[0].mxu0 %v865
        %v1089 = vpop.f32.mrb[0].mxu0
        %v1090 = vadd.f32 %v886, %v1089
        %v1091 = vpop.f32.mrb[0].mxu0
        %v1092 = vpop.f32.mrb[0].mxu0
        %v1093 = vadd.f32 %v886, %v1092
        %v1094 = vpop.f32.mrb[0].mxu0
        %1095 = vdwg.mxu0
        %v1096 = vpack.c.bf16 %v973, %v970
        %v1097 = vpack.c.bf16 %v981, %v978
        %v1098 = vpack.c.bf16 %v989, %v986
        %v1099 = vpack.c.bf16 %v997, %v994
        %v1100 = vpack.c.bf16 %v1005, %v1002
        %v1101 = vpack.c.bf16 %v1013, %v1010
        %v1102 = vpack.c.bf16 %v1021, %v1018
        %v1103 = vpack.c.bf16 %v1029, %v1026
        %v1104 = vpack.c.bf16 %v1037, %v1034
        %v1105 = vpack.c.bf16 %v1045, %v1042
        %v1106 = vpack.c.bf16 %v1053, %v1050
        %v1107 = vpack.c.bf16 %v1061, %v1058
        %v1108 = vpack.c.bf16 %v1069, %v1066
        %v1109 = vpack.c.bf16 %v1077, %v1074
        %v1110 = vpack.c.bf16 %v1085, %v1082
        %v1111 = vpack.c.bf16 %v1093, %v1090
        %v1128 = vunpack.c.l.b16 %v1096
        %v1129 = vunpack.c.h.b16 %v1096
        %v1130 = vunpack.c.l.b16 %v1097
        %v1131 = vunpack.c.h.b16 %v1097
        %v1132 = vunpack.c.l.b16 %v1098
        %v1133 = vunpack.c.h.b16 %v1098
        %v1134 = vunpack.c.l.b16 %v1099
        %v1135 = vunpack.c.h.b16 %v1099
        %v1136 = vunpack.c.l.b16 %v1100
        %v1137 = vunpack.c.h.b16 %v1100
        %v1138 = vunpack.c.l.b16 %v1101
        %v1139 = vunpack.c.h.b16 %v1101
        %v1140 = vunpack.c.l.b16 %v1102
        %v1141 = vunpack.c.h.b16 %v1102
        %v1142 = vunpack.c.l.b16 %v1103
        %v1143 = vunpack.c.h.b16 %v1103
        %v1144 = vunpack.c.l.b16 %v1104
        %v1145 = vunpack.c.h.b16 %v1104
        %v1146 = vunpack.c.l.b16 %v1105
        %v1147 = vunpack.c.h.b16 %v1105
        %v1148 = vunpack.c.l.b16 %v1106
        %v1149 = vunpack.c.h.b16 %v1106
        %v1150 = vunpack.c.l.b16 %v1107
        %v1151 = vunpack.c.h.b16 %v1107
        %v1152 = vunpack.c.l.b16 %v1108
        %v1153 = vunpack.c.h.b16 %v1108
        %v1154 = vunpack.c.l.b16 %v1109
        %v1155 = vunpack.c.h.b16 %v1109
        %v1156 = vunpack.c.l.b16 %v1110
        %v1157 = vunpack.c.h.b16 %v1110
        %v1158 = vunpack.c.l.b16 %v1111
        %v1159 = vunpack.c.h.b16 %v1111
        %v1160 = vpack.c.b16 %v1128, %v1128
        %v1161 = vpack.c.b16 %v1129, %v1129
        %v1162 = vpack.c.b16 %v1130, %v1130
        %v1163 = vpack.c.b16 %v1131, %v1131
        %v1164 = vpack.c.b16 %v1132, %v1132
        %v1165 = vpack.c.b16 %v1133, %v1133
        %v1166 = vpack.c.b16 %v1134, %v1134
        %v1167 = vpack.c.b16 %v1135, %v1135
        %v1168 = vpack.c.b16 %v1136, %v1136
        %v1169 = vpack.c.b16 %v1137, %v1137
        %v1170 = vpack.c.b16 %v1138, %v1138
        %v1171 = vpack.c.b16 %v1139, %v1139
        %v1172 = vpack.c.b16 %v1140, %v1140
        %v1173 = vpack.c.b16 %v1141, %v1141
        %v1174 = vpack.c.b16 %v1142, %v1142
        %v1175 = vpack.c.b16 %v1143, %v1143
        %v1176 = vpack.c.b16 %v1144, %v1144
        %v1177 = vpack.c.b16 %v1145, %v1145
        %v1178 = vpack.c.b16 %v1146, %v1146
        %v1179 = vpack.c.b16 %v1147, %v1147
        %v1180 = vpack.c.b16 %v1148, %v1148
        %v1181 = vpack.c.b16 %v1149, %v1149
        %v1182 = vpack.c.b16 %v1150, %v1150
        %v1183 = vpack.c.b16 %v1151, %v1151
        %v1184 = vpack.c.b16 %v1152, %v1152
        %v1185 = vpack.c.b16 %v1153, %v1153
        %v1186 = vpack.c.b16 %v1154, %v1154
        %v1187 = vpack.c.b16 %v1155, %v1155
        %v1188 = vpack.c.b16 %v1156, %v1156
        %v1189 = vpack.c.b16 %v1157, %v1157
        %v1190 = vpack.c.b16 %v1158, %v1158
        %v1191 = vpack.c.b16 %v1159, %v1159
        %1224 = vst [vmem:[%s195] sm:$0xf] %v1160
        %1225 = vst [vmem:[%s195 + $0x4] sm:$0xf] %v1161
        %1226 = vst [vmem:[%s195 + $0x8] sm:$0xf] %v1162
        %1227 = vst [vmem:[%s195 + $0xc] sm:$0xf] %v1163
        %1228 = vst [vmem:[%s195 + $0x10] sm:$0xf] %v1164
        %1229 = vst [vmem:[%s195 + $0x14] sm:$0xf] %v1165
        %1230 = vst [vmem:[%s195 + $0x18] sm:$0xf] %v1166
        %1231 = vst [vmem:[%s195 + $0x1c] sm:$0xf] %v1167
        %1232 = vst [vmem:[%s195 + $0x20] sm:$0xf] %v1168
        %1233 = vst [vmem:[%s195 + $0x24] sm:$0xf] %v1169
        %1234 = vst [vmem:[%s195 + $0x28] sm:$0xf] %v1170
        %1235 = vst [vmem:[%s195 + $0x2c] sm:$0xf] %v1171
        %1236 = vst [vmem:[%s195 + $0x30] sm:$0xf] %v1172
        %1237 = vst [vmem:[%s195 + $0x34] sm:$0xf] %v1173
        %1238 = vst [vmem:[%s195 + $0x38] sm:$0xf] %v1174
        %1239 = vst [vmem:[%s195 + $0x3c] sm:$0xf] %v1175
        %1240 = vst [vmem:[%s195 + $0x40] sm:$0xf] %v1176
        %1241 = vst [vmem:[%s195 + $0x44] sm:$0xf] %v1177
        %1242 = vst [vmem:[%s195 + $0x48] sm:$0xf] %v1178
        %1243 = vst [vmem:[%s195 + $0x4c] sm:$0xf] %v1179
        %1244 = vst [vmem:[%s195 + $0x50] sm:$0xf] %v1180
        %1245 = vst [vmem:[%s195 + $0x54] sm:$0xf] %v1181
        %1246 = vst [vmem:[%s195 + $0x58] sm:$0xf] %v1182
        %1247 = vst [vmem:[%s195 + $0x5c] sm:$0xf] %v1183
        %1248 = vst [vmem:[%s195 + $0x60] sm:$0xf] %v1184
        %1249 = vst [vmem:[%s195 + $0x64] sm:$0xf] %v1185
        %1250 = vst [vmem:[%s195 + $0x68] sm:$0xf] %v1186
        %1251 = vst [vmem:[%s195 + $0x6c] sm:$0xf] %v1187
        %1252 = vst [vmem:[%s195 + $0x70] sm:$0xf] %v1188
        %1253 = vst [vmem:[%s195 + $0x74] sm:$0xf] %v1189
        %1254 = vst [vmem:[%s195 + $0x78] sm:$0xf] %v1190
        %1255 = vst [vmem:[%s195 + $0x7c] sm:$0xf] %v1191
        %s1256 = scalar_lea.vmem %s1, 192
        %v1257 = vld [vmem:[%s1256] sm:$0xf]
        %v1258 = vld [vmem:[%s1256 + $0x4] sm:$0xf]
        %v1259 = vld [vmem:[%s1256 + $0x8] sm:$0xf]
        %v1260 = vld [vmem:[%s1256 + $0xc] sm:$0xf]
        %v1261 = vld [vmem:[%s1256 + $0x10] sm:$0xf]
        %v1262 = vld [vmem:[%s1256 + $0x14] sm:$0xf]
        %v1263 = vld [vmem:[%s1256 + $0x18] sm:$0xf]
        %v1264 = vld [vmem:[%s1256 + $0x1c] sm:$0xf]
        %v1265 = vld [vmem:[%s1256 + $0x20] sm:$0xf]
        %v1266 = vld [vmem:[%s1256 + $0x24] sm:$0xf]
        %v1267 = vld [vmem:[%s1256 + $0x28] sm:$0xf]
        %v1268 = vld [vmem:[%s1256 + $0x2c] sm:$0xf]
        %v1269 = vld [vmem:[%s1256 + $0x30] sm:$0xf]
        %v1270 = vld [vmem:[%s1256 + $0x34] sm:$0xf]
        %v1271 = vld [vmem:[%s1256 + $0x38] sm:$0xf]
        %v1272 = vld [vmem:[%s1256 + $0x3c] sm:$0xf]
        %v1273 = vlaneseq
        %v1274 = vshrl.u32 %v1273, 7
        %v1275 = vsub.s32 3, %v1274
        %v1276 = vrot.slane %v310, %v1275
        %v1293 = vunpack.c.l.b16 %v1257
        %v1294 = vunpack.c.l.b16 %v1258
        %v1295 = vunpack.c.l.b16 %v1259
        %v1296 = vunpack.c.l.b16 %v1260
        %v1297 = vunpack.c.l.b16 %v1261
        %v1298 = vunpack.c.l.b16 %v1262
        %v1299 = vunpack.c.l.b16 %v1263
        %v1300 = vunpack.c.l.b16 %v1264
        %v1301 = vunpack.c.l.b16 %v1265
        %v1302 = vunpack.c.l.b16 %v1266
        %v1303 = vunpack.c.l.b16 %v1267
        %v1304 = vunpack.c.l.b16 %v1268
        %v1305 = vunpack.c.l.b16 %v1269
        %v1306 = vunpack.c.l.b16 %v1270
        %v1307 = vunpack.c.l.b16 %v1271
        %v1308 = vunpack.c.l.b16 %v1272
        %v1309 = vpack.c.b16 %v1294, %v1293
        %v1310 = vpack.c.b16 %v1296, %v1295
        %v1311 = vpack.c.b16 %v1298, %v1297
        %v1312 = vpack.c.b16 %v1300, %v1299
        %v1313 = vpack.c.b16 %v1302, %v1301
        %v1314 = vpack.c.b16 %v1304, %v1303
        %v1315 = vpack.c.b16 %v1306, %v1305
        %v1316 = vpack.c.b16 %v1308, %v1307
        %1325 = vmatprep.subr.bf16.mxu0 0
        %1326 = vmatpush1.bf16.msra.mxu0 %v1309
        %1327 = vmatprep.subr.bf16.mxu0 0
        %1328 = vmatpush1.bf16.msra.mxu0 %v1310
        %1329 = vmatprep.subr.bf16.mxu0 0
        %1330 = vmatpush1.bf16.msra.mxu0 %v1311
        %1331 = vmatprep.subr.bf16.mxu0 0
        %1332 = vmatpush1.bf16.msra.mxu0 %v1312
        %1333 = vmatprep.subr.bf16.mxu0 0
        %1334 = vmatpush1.bf16.msra.mxu0 %v1313
        %1335 = vmatprep.subr.bf16.mxu0 0
        %1336 = vmatpush1.bf16.msra.mxu0 %v1314
        %1337 = vmatprep.subr.bf16.mxu0 0
        %1338 = vmatpush1.bf16.msra.mxu0 %v1315
        %1339 = vmatprep.subr.bf16.mxu0 0
        %1340 = vmatpush1.bf16.msra.mxu0 %v1316
        %1341 = vmatprep.subr.bf16.mxu0 0
        %1342 = vmatpush1.bf16.msra.mxu0 0
        %1343 = vmatprep.subr.bf16.mxu0 0
        %1344 = vmatpush1.bf16.msra.mxu0 0
        %1345 = vmatprep.subr.bf16.mxu0 0
        %1346 = vmatpush1.bf16.msra.mxu0 0
        %1347 = vmatprep.subr.bf16.mxu0 0
        %1348 = vmatpush1.bf16.msra.mxu0 0
        %1349 = vmatprep.subr.bf16.mxu0 0
        %1350 = vmatpush1.bf16.msra.mxu0 0
        %1351 = vmatprep.subr.bf16.mxu0 0
        %1352 = vmatpush1.bf16.msra.mxu0 0
        %1353 = vmatprep.subr.bf16.mxu0 0
        %1354 = vmatpush1.bf16.msra.mxu0 0
        %1355 = vmatprep.subr.bf16.mxu0 0
        %1356 = vmatpush1.bf16.msra.mxu0 0
        %1357 = vmatprep.mubr.bf16.mxu0 0
        %1358 = vmatmul.mubr.bf16.gmra.mrb[0].mxu0 %v1096
        %v1359 = vpop.f32.mrb[0].mxu0
        %v1360 = vadd.f32 %v1276, %v1359
        %v1361 = vpop.f32.mrb[0].mxu0
        %v1362 = vpop.f32.mrb[0].mxu0
        %v1363 = vadd.f32 %v1276, %v1362
        %v1364 = vpop.f32.mrb[0].mxu0
        %1365 = vmatprep.mubr.bf16.mxu0 0
        %1366 = vmatmul.mubr.bf16.gmra.mrb[0].mxu0 %v1097
        %v1367 = vpop.f32.mrb[0].mxu0
        %v1368 = vadd.f32 %v1276, %v1367
        %v1369 = vpop.f32.mrb[0].mxu0
        %v1370 = vpop.f32.mrb[0].mxu0
        %v1371 = vadd.f32 %v1276, %v1370
        %v1372 = vpop.f32.mrb[0].mxu0
        %1373 = vmatprep.mubr.bf16.mxu0 0
        %1374 = vmatmul.mubr.bf16.gmra.mrb[0].mxu0 %v1098
        %v1375 = vpop.f32.mrb[0].mxu0
        %v1376 = vadd.f32 %v1276, %v1375
        %v1377 = vpop.f32.mrb[0].mxu0
        %v1378 = vpop.f32.mrb[0].mxu0
        %v1379 = vadd.f32 %v1276, %v1378
        %v1380 = vpop.f32.mrb[0].mxu0
        %1381 = vmatprep.mubr.bf16.mxu0 0
        %1382 = vmatmul.mubr.bf16.gmra.mrb[0].mxu0 %v1099
        %v1383 = vpop.f32.mrb[0].mxu0
        %v1384 = vadd.f32 %v1276, %v1383
        %v1385 = vpop.f32.mrb[0].mxu0
        %v1386 = vpop.f32.mrb[0].mxu0
        %v1387 = vadd.f32 %v1276, %v1386
        %v1388 = vpop.f32.mrb[0].mxu0
        %1389 = vmatprep.mubr.bf16.mxu0 0
        %1390 = vmatmul.mubr.bf16.gmra.mrb[0].mxu0 %v1100
        %v1391 = vpop.f32.mrb[0].mxu0
        %v1392 = vadd.f32 %v1276, %v1391
        %v1393 = vpop.f32.mrb[0].mxu0
        %v1394 = vpop.f32.mrb[0].mxu0
        %v1395 = vadd.f32 %v1276, %v1394
        %v1396 = vpop.f32.mrb[0].mxu0
        %1397 = vmatprep.mubr.bf16.mxu0 0
        %1398 = vmatmul.mubr.bf16.gmra.mrb[0].mxu0 %v1101
        %v1399 = vpop.f32.mrb[0].mxu0
        %v1400 = vadd.f32 %v1276, %v1399
        %v1401 = vpop.f32.mrb[0].mxu0
        %v1402 = vpop.f32.mrb[0].mxu0
        %v1403 = vadd.f32 %v1276, %v1402
        %v1404 = vpop.f32.mrb[0].mxu0
        %1405 = vmatprep.mubr.bf16.mxu0 0
        %1406 = vmatmul.mubr.bf16.gmra.mrb[0].mxu0 %v1102
        %v1407 = vpop.f32.mrb[0].mxu0
        %v1408 = vadd.f32 %v1276, %v1407
        %v1409 = vpop.f32.mrb[0].mxu0
        %v1410 = vpop.f32.mrb[0].mxu0
        %v1411 = vadd.f32 %v1276, %v1410
        %v1412 = vpop.f32.mrb[0].mxu0
        %1413 = vmatprep.mubr.bf16.mxu0 0
        %1414 = vmatmul.mubr.bf16.gmra.mrb[0].mxu0 %v1103
        %v1415 = vpop.f32.mrb[0].mxu0
        %v1416 = vadd.f32 %v1276, %v1415
        %v1417 = vpop.f32.mrb[0].mxu0
        %v1418 = vpop.f32.mrb[0].mxu0
        %v1419 = vadd.f32 %v1276, %v1418
        %v1420 = vpop.f32.mrb[0].mxu0
        %1421 = vmatprep.mubr.bf16.mxu0 0
        %1422 = vmatmul.mubr.bf16.gmra.mrb[0].mxu0 %v1104
        %v1423 = vpop.f32.mrb[0].mxu0
        %v1424 = vadd.f32 %v1276, %v1423
        %v1425 = vpop.f32.mrb[0].mxu0
        %v1426 = vpop.f32.mrb[0].mxu0
        %v1427 = vadd.f32 %v1276, %v1426
        %v1428 = vpop.f32.mrb[0].mxu0
        %1429 = vmatprep.mubr.bf16.mxu0 0
        %1430 = vmatmul.mubr.bf16.gmra.mrb[0].mxu0 %v1105
        %v1431 = vpop.f32.mrb[0].mxu0
        %v1432 = vadd.f32 %v1276, %v1431
        %v1433 = vpop.f32.mrb[0].mxu0
        %v1434 = vpop.f32.mrb[0].mxu0
        %v1435 = vadd.f32 %v1276, %v1434
        %v1436 = vpop.f32.mrb[0].mxu0
        %1437 = vmatprep.mubr.bf16.mxu0 0
        %1438 = vmatmul.mubr.bf16.gmra.mrb[0].mxu0 %v1106
        %v1439 = vpop.f32.mrb[0].mxu0
        %v1440 = vadd.f32 %v1276, %v1439
        %v1441 = vpop.f32.mrb[0].mxu0
        %v1442 = vpop.f32.mrb[0].mxu0
        %v1443 = vadd.f32 %v1276, %v1442
        %v1444 = vpop.f32.mrb[0].mxu0
        %1445 = vmatprep.mubr.bf16.mxu0 0
        %1446 = vmatmul.mubr.bf16.gmra.mrb[0].mxu0 %v1107
        %v1447 = vpop.f32.mrb[0].mxu0
        %v1448 = vadd.f32 %v1276, %v1447
        %v1449 = vpop.f32.mrb[0].mxu0
        %v1450 = vpop.f32.mrb[0].mxu0
        %v1451 = vadd.f32 %v1276, %v1450
        %v1452 = vpop.f32.mrb[0].mxu0
        %1453 = vmatprep.mubr.bf16.mxu0 0
        %1454 = vmatmul.mubr.bf16.gmra.mrb[0].mxu0 %v1108
        %v1455 = vpop.f32.mrb[0].mxu0
        %v1456 = vadd.f32 %v1276, %v1455
        %v1457 = vpop.f32.mrb[0].mxu0
        %v1458 = vpop.f32.mrb[0].mxu0
        %v1459 = vadd.f32 %v1276, %v1458
        %v1460 = vpop.f32.mrb[0].mxu0
        %1461 = vmatprep.mubr.bf16.mxu0 0
        %1462 = vmatmul.mubr.bf16.gmra.mrb[0].mxu0 %v1109
        %v1463 = vpop.f32.mrb[0].mxu0
        %v1464 = vadd.f32 %v1276, %v1463
        %v1465 = vpop.f32.mrb[0].mxu0
        %v1466 = vpop.f32.mrb[0].mxu0
        %v1467 = vadd.f32 %v1276, %v1466
        %v1468 = vpop.f32.mrb[0].mxu0
        %1469 = vmatprep.mubr.bf16.mxu0 0
        %1470 = vmatmul.mubr.bf16.gmra.mrb[0].mxu0 %v1110
        %v1471 = vpop.f32.mrb[0].mxu0
        %v1472 = vadd.f32 %v1276, %v1471
        %v1473 = vpop.f32.mrb[0].mxu0
        %v1474 = vpop.f32.mrb[0].mxu0
        %v1475 = vadd.f32 %v1276, %v1474
        %v1476 = vpop.f32.mrb[0].mxu0
        %1477 = vmatprep.mubr.bf16.mxu0 0
        %1478 = vmatmul.mubr.bf16.gmra.mrb[0].mxu0 %v1111
        %v1479 = vpop.f32.mrb[0].mxu0
        %v1480 = vadd.f32 %v1276, %v1479
        %v1481 = vpop.f32.mrb[0].mxu0
        %v1482 = vpop.f32.mrb[0].mxu0
        %v1483 = vadd.f32 %v1276, %v1482
        %v1484 = vpop.f32.mrb[0].mxu0
        %1485 = vdwg.mxu0
        %v1486 = vmax.f32 %v1360, 0.0
        %v1487 = vmax.f32 %v1363, 0.0
        %v1488 = vmax.f32 %v1368, 0.0
        %v1489 = vmax.f32 %v1371, 0.0
        %v1490 = vmax.f32 %v1376, 0.0
        %v1491 = vmax.f32 %v1379, 0.0
        %v1492 = vmax.f32 %v1384, 0.0
        %v1493 = vmax.f32 %v1387, 0.0
        %v1494 = vmax.f32 %v1392, 0.0
        %v1495 = vmax.f32 %v1395, 0.0
        %v1496 = vmax.f32 %v1400, 0.0
        %v1497 = vmax.f32 %v1403, 0.0
        %v1498 = vmax.f32 %v1408, 0.0
        %v1499 = vmax.f32 %v1411, 0.0
        %v1500 = vmax.f32 %v1416, 0.0
        %v1501 = vmax.f32 %v1419, 0.0
        %v1502 = vmax.f32 %v1424, 0.0
        %v1503 = vmax.f32 %v1427, 0.0
        %v1504 = vmax.f32 %v1432, 0.0
        %v1505 = vmax.f32 %v1435, 0.0
        %v1506 = vmax.f32 %v1440, 0.0
        %v1507 = vmax.f32 %v1443, 0.0
        %v1508 = vmax.f32 %v1448, 0.0
        %v1509 = vmax.f32 %v1451, 0.0
        %v1510 = vmax.f32 %v1456, 0.0
        %v1511 = vmax.f32 %v1459, 0.0
        %v1512 = vmax.f32 %v1464, 0.0
        %v1513 = vmax.f32 %v1467, 0.0
        %v1514 = vmax.f32 %v1472, 0.0
        %v1515 = vmax.f32 %v1475, 0.0
        %v1516 = vmax.f32 %v1480, 0.0
        %v1517 = vmax.f32 %v1483, 0.0
        %v1518 = vpack.c.bf16 %v1487, %v1486
        %v1519 = vpack.c.bf16 %v1489, %v1488
        %v1520 = vpack.c.bf16 %v1491, %v1490
        %v1521 = vpack.c.bf16 %v1493, %v1492
        %v1522 = vpack.c.bf16 %v1495, %v1494
        %v1523 = vpack.c.bf16 %v1497, %v1496
        %v1524 = vpack.c.bf16 %v1499, %v1498
        %v1525 = vpack.c.bf16 %v1501, %v1500
        %v1526 = vpack.c.bf16 %v1503, %v1502
        %v1527 = vpack.c.bf16 %v1505, %v1504
        %v1528 = vpack.c.bf16 %v1507, %v1506
        %v1529 = vpack.c.bf16 %v1509, %v1508
        %v1530 = vpack.c.bf16 %v1511, %v1510
        %v1531 = vpack.c.bf16 %v1513, %v1512
        %v1532 = vpack.c.bf16 %v1515, %v1514
        %v1533 = vpack.c.bf16 %v1517, %v1516
        %s1534 = scalar_lea.vmem %s1, 256
        %v1535 = vld [vmem:[%s1534] sm:$0xf]
        %v1536 = vld [vmem:[%s1534 + $0x4] sm:$0xf]
        %v1537 = vld [vmem:[%s1534 + $0x8] sm:$0xf]
        %v1538 = vld [vmem:[%s1534 + $0xc] sm:$0xf]
        %v1539 = vld [vmem:[%s1534 + $0x10] sm:$0xf]
        %v1540 = vld [vmem:[%s1534 + $0x14] sm:$0xf]
        %v1541 = vld [vmem:[%s1534 + $0x18] sm:$0xf]
        %v1542 = vld [vmem:[%s1534 + $0x1c] sm:$0xf]
        %v1543 = vld [vmem:[%s1534 + $0x20] sm:$0xf]
        %v1544 = vld [vmem:[%s1534 + $0x24] sm:$0xf]
        %v1545 = vld [vmem:[%s1534 + $0x28] sm:$0xf]
        %v1546 = vld [vmem:[%s1534 + $0x2c] sm:$0xf]
        %v1547 = vld [vmem:[%s1534 + $0x30] sm:$0xf]
        %v1548 = vld [vmem:[%s1534 + $0x34] sm:$0xf]
        %v1549 = vld [vmem:[%s1534 + $0x38] sm:$0xf]
        %v1550 = vld [vmem:[%s1534 + $0x3c] sm:$0xf]
        %v1551 = vlaneseq
        %v1552 = vshrl.u32 %v1551, 7
        %v1553 = vsub.s32 4, %v1552
        %v1554 = vrot.slane %v310, %v1553
        %v1571 = vunpack.c.l.b16 %v1535
        %v1572 = vunpack.c.l.b16 %v1536
        %v1573 = vunpack.c.l.b16 %v1537
        %v1574 = vunpack.c.l.b16 %v1538
        %v1575 = vunpack.c.l.b16 %v1539
        %v1576 = vunpack.c.l.b16 %v1540
        %v1577 = vunpack.c.l.b16 %v1541
        %v1578 = vunpack.c.l.b16 %v1542
        %v1579 = vunpack.c.l.b16 %v1543
        %v1580 = vunpack.c.l.b16 %v1544
        %v1581 = vunpack.c.l.b16 %v1545
        %v1582 = vunpack.c.l.b16 %v1546
        %v1583 = vunpack.c.l.b16 %v1547
        %v1584 = vunpack.c.l.b16 %v1548
        %v1585 = vunpack.c.l.b16 %v1549
        %v1586 = vunpack.c.l.b16 %v1550
        %v1587 = vpack.c.b16 %v1572, %v1571
        %v1588 = vpack.c.b16 %v1574, %v1573
        %v1589 = vpack.c.b16 %v1576, %v1575
        %v1590 = vpack.c.b16 %v1578, %v1577
        %v1591 = vpack.c.b16 %v1580, %v1579
        %v1592 = vpack.c.b16 %v1582, %v1581
        %v1593 = vpack.c.b16 %v1584, %v1583
        %v1594 = vpack.c.b16 %v1586, %v1585
        %1603 = vmatprep.subr.bf16.mxu0 0
        %1604 = vmatpush1.bf16.msra.mxu0 %v1587
        %1605 = vmatprep.subr.bf16.mxu0 0
        %1606 = vmatpush1.bf16.msra.mxu0 %v1588
        %1607 = vmatprep.subr.bf16.mxu0 0
        %1608 = vmatpush1.bf16.msra.mxu0 %v1589
        %1609 = vmatprep.subr.bf16.mxu0 0
        %1610 = vmatpush1.bf16.msra.mxu0 %v1590
        %1611 = vmatprep.subr.bf16.mxu0 0
        %1612 = vmatpush1.bf16.msra.mxu0 %v1591
        %1613 = vmatprep.subr.bf16.mxu0 0
        %1614 = vmatpush1.bf16.msra.mxu0 %v1592
        %1615 = vmatprep.subr.bf16.mxu0 0
        %1616 = vmatpush1.bf16.msra.mxu0 %v1593
        %1617 = vmatprep.subr.bf16.mxu0 0
        %1618 = vmatpush1.bf16.msra.mxu0 %v1594
        %1619 = vmatprep.subr.bf16.mxu0 0
        %1620 = vmatpush1.bf16.msra.mxu0 0
        %1621 = vmatprep.subr.bf16.mxu0 0
        %1622 = vmatpush1.bf16.msra.mxu0 0
        %1623 = vmatprep.subr.bf16.mxu0 0
        %1624 = vmatpush1.bf16.msra.mxu0 0
        %1625 = vmatprep.subr.bf16.mxu0 0
        %1626 = vmatpush1.bf16.msra.mxu0 0
        %1627 = vmatprep.subr.bf16.mxu0 0
        %1628 = vmatpush1.bf16.msra.mxu0 0
        %1629 = vmatprep.subr.bf16.mxu0 0
        %1630 = vmatpush1.bf16.msra.mxu0 0
        %1631 = vmatprep.subr.bf16.mxu0 0
        %1632 = vmatpush1.bf16.msra.mxu0 0
        %1633 = vmatprep.subr.bf16.mxu0 0
        %1634 = vmatpush1.bf16.msra.mxu0 0
        %1635 = vmatprep.mubr.bf16.mxu0 0
        %1636 = vmatmul.mubr.bf16.gmra.mrb[0].mxu0 %v1518
        %v1637 = vpop.f32.mrb[0].mxu0
        %v1638 = vadd.f32 %v1554, %v1637
        %v1639 = vpop.f32.mrb[0].mxu0
        %v1640 = vpop.f32.mrb[0].mxu0
        %v1641 = vadd.f32 %v1554, %v1640
        %v1642 = vpop.f32.mrb[0].mxu0
        %1643 = vmatprep.mubr.bf16.mxu0 0
        %1644 = vmatmul.mubr.bf16.gmra.mrb[0].mxu0 %v1519
        %v1645 = vpop.f32.mrb[0].mxu0
        %v1646 = vadd.f32 %v1554, %v1645
        %v1647 = vpop.f32.mrb[0].mxu0
        %v1648 = vpop.f32.mrb[0].mxu0
        %v1649 = vadd.f32 %v1554, %v1648
        %v1650 = vpop.f32.mrb[0].mxu0
        %1651 = vmatprep.mubr.bf16.mxu0 0
        %1652 = vmatmul.mubr.bf16.gmra.mrb[0].mxu0 %v1520
        %v1653 = vpop.f32.mrb[0].mxu0
        %v1654 = vadd.f32 %v1554, %v1653
        %v1655 = vpop.f32.mrb[0].mxu0
        %v1656 = vpop.f32.mrb[0].mxu0
        %v1657 = vadd.f32 %v1554, %v1656
        %v1658 = vpop.f32.mrb[0].mxu0
        %1659 = vmatprep.mubr.bf16.mxu0 0
        %1660 = vmatmul.mubr.bf16.gmra.mrb[0].mxu0 %v1521
        %v1661 = vpop.f32.mrb[0].mxu0
        %v1662 = vadd.f32 %v1554, %v1661
        %v1663 = vpop.f32.mrb[0].mxu0
        %v1664 = vpop.f32.mrb[0].mxu0
        %v1665 = vadd.f32 %v1554, %v1664
        %v1666 = vpop.f32.mrb[0].mxu0
        %1667 = vmatprep.mubr.bf16.mxu0 0
        %1668 = vmatmul.mubr.bf16.gmra.mrb[0].mxu0 %v1522
        %v1669 = vpop.f32.mrb[0].mxu0
        %v1670 = vadd.f32 %v1554, %v1669
        %v1671 = vpop.f32.mrb[0].mxu0
        %v1672 = vpop.f32.mrb[0].mxu0
        %v1673 = vadd.f32 %v1554, %v1672
        %v1674 = vpop.f32.mrb[0].mxu0
        %1675 = vmatprep.mubr.bf16.mxu0 0
        %1676 = vmatmul.mubr.bf16.gmra.mrb[0].mxu0 %v1523
        %v1677 = vpop.f32.mrb[0].mxu0
        %v1678 = vadd.f32 %v1554, %v1677
        %v1679 = vpop.f32.mrb[0].mxu0
        %v1680 = vpop.f32.mrb[0].mxu0
        %v1681 = vadd.f32 %v1554, %v1680
        %v1682 = vpop.f32.mrb[0].mxu0
        %1683 = vmatprep.mubr.bf16.mxu0 0
        %1684 = vmatmul.mubr.bf16.gmra.mrb[0].mxu0 %v1524
        %v1685 = vpop.f32.mrb[0].mxu0
        %v1686 = vadd.f32 %v1554, %v1685
        %v1687 = vpop.f32.mrb[0].mxu0
        %v1688 = vpop.f32.mrb[0].mxu0
        %v1689 = vadd.f32 %v1554, %v1688
        %v1690 = vpop.f32.mrb[0].mxu0
        %1691 = vmatprep.mubr.bf16.mxu0 0
        %1692 = vmatmul.mubr.bf16.gmra.mrb[0].mxu0 %v1525
        %v1693 = vpop.f32.mrb[0].mxu0
        %v1694 = vadd.f32 %v1554, %v1693
        %v1695 = vpop.f32.mrb[0].mxu0
        %v1696 = vpop.f32.mrb[0].mxu0
        %v1697 = vadd.f32 %v1554, %v1696
        %v1698 = vpop.f32.mrb[0].mxu0
        %1699 = vmatprep.mubr.bf16.mxu0 0
        %1700 = vmatmul.mubr.bf16.gmra.mrb[0].mxu0 %v1526
        %v1701 = vpop.f32.mrb[0].mxu0
        %v1702 = vadd.f32 %v1554, %v1701
        %v1703 = vpop.f32.mrb[0].mxu0
        %v1704 = vpop.f32.mrb[0].mxu0
        %v1705 = vadd.f32 %v1554, %v1704
        %v1706 = vpop.f32.mrb[0].mxu0
        %1707 = vmatprep.mubr.bf16.mxu0 0
        %1708 = vmatmul.mubr.bf16.gmra.mrb[0].mxu0 %v1527
        %v1709 = vpop.f32.mrb[0].mxu0
        %v1710 = vadd.f32 %v1554, %v1709
        %v1711 = vpop.f32.mrb[0].mxu0
        %v1712 = vpop.f32.mrb[0].mxu0
        %v1713 = vadd.f32 %v1554, %v1712
        %v1714 = vpop.f32.mrb[0].mxu0
        %1715 = vmatprep.mubr.bf16.mxu0 0
        %1716 = vmatmul.mubr.bf16.gmra.mrb[0].mxu0 %v1528
        %v1717 = vpop.f32.mrb[0].mxu0
        %v1718 = vadd.f32 %v1554, %v1717
        %v1719 = vpop.f32.mrb[0].mxu0
        %v1720 = vpop.f32.mrb[0].mxu0
        %v1721 = vadd.f32 %v1554, %v1720
        %v1722 = vpop.f32.mrb[0].mxu0
        %1723 = vmatprep.mubr.bf16.mxu0 0
        %1724 = vmatmul.mubr.bf16.gmra.mrb[0].mxu0 %v1529
        %v1725 = vpop.f32.mrb[0].mxu0
        %v1726 = vadd.f32 %v1554, %v1725
        %v1727 = vpop.f32.mrb[0].mxu0
        %v1728 = vpop.f32.mrb[0].mxu0
        %v1729 = vadd.f32 %v1554, %v1728
        %v1730 = vpop.f32.mrb[0].mxu0
        %1731 = vmatprep.mubr.bf16.mxu0 0
        %1732 = vmatmul.mubr.bf16.gmra.mrb[0].mxu0 %v1530
        %v1733 = vpop.f32.mrb[0].mxu0
        %v1734 = vadd.f32 %v1554, %v1733
        %v1735 = vpop.f32.mrb[0].mxu0
        %v1736 = vpop.f32.mrb[0].mxu0
        %v1737 = vadd.f32 %v1554, %v1736
        %v1738 = vpop.f32.mrb[0].mxu0
        %1739 = vmatprep.mubr.bf16.mxu0 0
        %1740 = vmatmul.mubr.bf16.gmra.mrb[0].mxu0 %v1531
        %v1741 = vpop.f32.mrb[0].mxu0
        %v1742 = vadd.f32 %v1554, %v1741
        %v1743 = vpop.f32.mrb[0].mxu0
        %v1744 = vpop.f32.mrb[0].mxu0
        %v1745 = vadd.f32 %v1554, %v1744
        %v1746 = vpop.f32.mrb[0].mxu0
        %1747 = vmatprep.mubr.bf16.mxu0 0
        %1748 = vmatmul.mubr.bf16.gmra.mrb[0].mxu0 %v1532
        %v1749 = vpop.f32.mrb[0].mxu0
        %v1750 = vadd.f32 %v1554, %v1749
        %v1751 = vpop.f32.mrb[0].mxu0
        %v1752 = vpop.f32.mrb[0].mxu0
        %v1753 = vadd.f32 %v1554, %v1752
        %v1754 = vpop.f32.mrb[0].mxu0
        %1755 = vmatprep.mubr.bf16.mxu0 0
        %1756 = vmatmul.mubr.bf16.gmra.mrb[0].mxu0 %v1533
        %v1757 = vpop.f32.mrb[0].mxu0
        %v1758 = vadd.f32 %v1554, %v1757
        %v1759 = vpop.f32.mrb[0].mxu0
        %v1760 = vpop.f32.mrb[0].mxu0
        %v1761 = vadd.f32 %v1554, %v1760
        %v1762 = vpop.f32.mrb[0].mxu0
        %1763 = vdwg.mxu0
        %v1764 = vmax.f32 %v1638, 0.0
        %v1765 = vmax.f32 %v1641, 0.0
        %v1766 = vmax.f32 %v1646, 0.0
        %v1767 = vmax.f32 %v1649, 0.0
        %v1768 = vmax.f32 %v1654, 0.0
        %v1769 = vmax.f32 %v1657, 0.0
        %v1770 = vmax.f32 %v1662, 0.0
        %v1771 = vmax.f32 %v1665, 0.0
        %v1772 = vmax.f32 %v1670, 0.0
        %v1773 = vmax.f32 %v1673, 0.0
        %v1774 = vmax.f32 %v1678, 0.0
        %v1775 = vmax.f32 %v1681, 0.0
        %v1776 = vmax.f32 %v1686, 0.0
        %v1777 = vmax.f32 %v1689, 0.0
        %v1778 = vmax.f32 %v1694, 0.0
        %v1779 = vmax.f32 %v1697, 0.0
        %v1780 = vmax.f32 %v1702, 0.0
        %v1781 = vmax.f32 %v1705, 0.0
        %v1782 = vmax.f32 %v1710, 0.0
        %v1783 = vmax.f32 %v1713, 0.0
        %v1784 = vmax.f32 %v1718, 0.0
        %v1785 = vmax.f32 %v1721, 0.0
        %v1786 = vmax.f32 %v1726, 0.0
        %v1787 = vmax.f32 %v1729, 0.0
        %v1788 = vmax.f32 %v1734, 0.0
        %v1789 = vmax.f32 %v1737, 0.0
        %v1790 = vmax.f32 %v1742, 0.0
        %v1791 = vmax.f32 %v1745, 0.0
        %v1792 = vmax.f32 %v1750, 0.0
        %v1793 = vmax.f32 %v1753, 0.0
        %v1794 = vmax.f32 %v1758, 0.0
        %v1795 = vmax.f32 %v1761, 0.0
        %v1796 = vpack.c.bf16 %v1765, %v1764
        %v1797 = vpack.c.bf16 %v1767, %v1766
        %v1798 = vpack.c.bf16 %v1769, %v1768
        %v1799 = vpack.c.bf16 %v1771, %v1770
        %v1800 = vpack.c.bf16 %v1773, %v1772
        %v1801 = vpack.c.bf16 %v1775, %v1774
        %v1802 = vpack.c.bf16 %v1777, %v1776
        %v1803 = vpack.c.bf16 %v1779, %v1778
        %v1804 = vpack.c.bf16 %v1781, %v1780
        %v1805 = vpack.c.bf16 %v1783, %v1782
        %v1806 = vpack.c.bf16 %v1785, %v1784
        %v1807 = vpack.c.bf16 %v1787, %v1786
        %v1808 = vpack.c.bf16 %v1789, %v1788
        %v1809 = vpack.c.bf16 %v1791, %v1790
        %v1810 = vpack.c.bf16 %v1793, %v1792
        %v1811 = vpack.c.bf16 %v1795, %v1794
        %s1812 = scalar_lea.vmem %s1, 320
        %v1813 = vld [vmem:[%s1812] sm:$0xf]
        %v1814 = vld [vmem:[%s1812 + $0x4] sm:$0xf]
        %v1815 = vld [vmem:[%s1812 + $0x8] sm:$0xf]
        %v1816 = vld [vmem:[%s1812 + $0xc] sm:$0xf]
        %v1817 = vld [vmem:[%s1812 + $0x10] sm:$0xf]
        %v1818 = vld [vmem:[%s1812 + $0x14] sm:$0xf]
        %v1819 = vld [vmem:[%s1812 + $0x18] sm:$0xf]
        %v1820 = vld [vmem:[%s1812 + $0x1c] sm:$0xf]
        %v1821 = vld [vmem:[%s1812 + $0x20] sm:$0xf]
        %v1822 = vld [vmem:[%s1812 + $0x24] sm:$0xf]
        %v1823 = vld [vmem:[%s1812 + $0x28] sm:$0xf]
        %v1824 = vld [vmem:[%s1812 + $0x2c] sm:$0xf]
        %v1825 = vld [vmem:[%s1812 + $0x30] sm:$0xf]
        %v1826 = vld [vmem:[%s1812 + $0x34] sm:$0xf]
        %v1827 = vld [vmem:[%s1812 + $0x38] sm:$0xf]
        %v1828 = vld [vmem:[%s1812 + $0x3c] sm:$0xf]
        %v1829 = vlaneseq
        %v1830 = vshrl.u32 %v1829, 7
        %v1831 = vsub.s32 5, %v1830
        %v1832 = vrot.slane %v310, %v1831
        %v1849 = vunpack.c.l.b16 %v1813
        %v1850 = vunpack.c.l.b16 %v1814
        %v1851 = vunpack.c.l.b16 %v1815
        %v1852 = vunpack.c.l.b16 %v1816
        %v1853 = vunpack.c.l.b16 %v1817
        %v1854 = vunpack.c.l.b16 %v1818
        %v1855 = vunpack.c.l.b16 %v1819
        %v1856 = vunpack.c.l.b16 %v1820
        %v1857 = vunpack.c.l.b16 %v1821
        %v1858 = vunpack.c.l.b16 %v1822
        %v1859 = vunpack.c.l.b16 %v1823
        %v1860 = vunpack.c.l.b16 %v1824
        %v1861 = vunpack.c.l.b16 %v1825
        %v1862 = vunpack.c.l.b16 %v1826
        %v1863 = vunpack.c.l.b16 %v1827
        %v1864 = vunpack.c.l.b16 %v1828
        %v1865 = vpack.c.b16 %v1850, %v1849
        %v1866 = vpack.c.b16 %v1852, %v1851
        %v1867 = vpack.c.b16 %v1854, %v1853
        %v1868 = vpack.c.b16 %v1856, %v1855
        %v1869 = vpack.c.b16 %v1858, %v1857
        %v1870 = vpack.c.b16 %v1860, %v1859
        %v1871 = vpack.c.b16 %v1862, %v1861
        %v1872 = vpack.c.b16 %v1864, %v1863
        %1881 = vmatprep.subr.bf16.mxu0 0
        %1882 = vmatpush1.bf16.msra.mxu0 %v1865
        %1883 = vmatprep.subr.bf16.mxu0 0
        %1884 = vmatpush1.bf16.msra.mxu0 %v1866
        %1885 = vmatprep.subr.bf16.mxu0 0
        %1886 = vmatpush1.bf16.msra.mxu0 %v1867
        %1887 = vmatprep.subr.bf16.mxu0 0
        %1888 = vmatpush1.bf16.msra.mxu0 %v1868
        %1889 = vmatprep.subr.bf16.mxu0 0
        %1890 = vmatpush1.bf16.msra.mxu0 %v1869
        %1891 = vmatprep.subr.bf16.mxu0 0
        %1892 = vmatpush1.bf16.msra.mxu0 %v1870
        %1893 = vmatprep.subr.bf16.mxu0 0
        %1894 = vmatpush1.bf16.msra.mxu0 %v1871
        %1895 = vmatprep.subr.bf16.mxu0 0
        %1896 = vmatpush1.bf16.msra.mxu0 %v1872
        %1897 = vmatprep.subr.bf16.mxu0 0
        %1898 = vmatpush1.bf16.msra.mxu0 0
        %1899 = vmatprep.subr.bf16.mxu0 0
        %1900 = vmatpush1.bf16.msra.mxu0 0
        %1901 = vmatprep.subr.bf16.mxu0 0
        %1902 = vmatpush1.bf16.msra.mxu0 0
        %1903 = vmatprep.subr.bf16.mxu0 0
        %1904 = vmatpush1.bf16.msra.mxu0 0
        %1905 = vmatprep.subr.bf16.mxu0 0
        %1906 = vmatpush1.bf16.msra.mxu0 0
        %1907 = vmatprep.subr.bf16.mxu0 0
        %1908 = vmatpush1.bf16.msra.mxu0 0
        %1909 = vmatprep.subr.bf16.mxu0 0
        %1910 = vmatpush1.bf16.msra.mxu0 0
        %1911 = vmatprep.subr.bf16.mxu0 0
        %1912 = vmatpush1.bf16.msra.mxu0 0
        %1913 = vmatprep.mubr.bf16.mxu0 0
        %1914 = vmatmul.mubr.bf16.gmra.mrb[0].mxu0 %v1796
        %v1915 = vpop.f32.mrb[0].mxu0
        %v1916 = vadd.f32 %v1832, %v1915
        %v1917 = vpop.f32.mrb[0].mxu0
        %v1918 = vpop.f32.mrb[0].mxu0
        %v1919 = vadd.f32 %v1832, %v1918
        %v1920 = vpop.f32.mrb[0].mxu0
        %1921 = vmatprep.mubr.bf16.mxu0 0
        %1922 = vmatmul.mubr.bf16.gmra.mrb[0].mxu0 %v1797
        %v1923 = vpop.f32.mrb[0].mxu0
        %v1924 = vadd.f32 %v1832, %v1923
        %v1925 = vpop.f32.mrb[0].mxu0
        %v1926 = vpop.f32.mrb[0].mxu0
        %v1927 = vadd.f32 %v1832, %v1926
        %v1928 = vpop.f32.mrb[0].mxu0
        %1929 = vmatprep.mubr.bf16.mxu0 0
        %1930 = vmatmul.mubr.bf16.gmra.mrb[0].mxu0 %v1798
        %v1931 = vpop.f32.mrb[0].mxu0
        %v1932 = vadd.f32 %v1832, %v1931
        %v1933 = vpop.f32.mrb[0].mxu0
        %v1934 = vpop.f32.mrb[0].mxu0
        %v1935 = vadd.f32 %v1832, %v1934
        %v1936 = vpop.f32.mrb[0].mxu0
        %1937 = vmatprep.mubr.bf16.mxu0 0
        %1938 = vmatmul.mubr.bf16.gmra.mrb[0].mxu0 %v1799
        %v1939 = vpop.f32.mrb[0].mxu0
        %v1940 = vadd.f32 %v1832, %v1939
        %v1941 = vpop.f32.mrb[0].mxu0
        %v1942 = vpop.f32.mrb[0].mxu0
        %v1943 = vadd.f32 %v1832, %v1942
        %v1944 = vpop.f32.mrb[0].mxu0
        %1945 = vmatprep.mubr.bf16.mxu0 0
        %1946 = vmatmul.mubr.bf16.gmra.mrb[0].mxu0 %v1800
        %v1947 = vpop.f32.mrb[0].mxu0
        %v1948 = vadd.f32 %v1832, %v1947
        %v1949 = vpop.f32.mrb[0].mxu0
        %v1950 = vpop.f32.mrb[0].mxu0
        %v1951 = vadd.f32 %v1832, %v1950
        %v1952 = vpop.f32.mrb[0].mxu0
        %1953 = vmatprep.mubr.bf16.mxu0 0
        %1954 = vmatmul.mubr.bf16.gmra.mrb[0].mxu0 %v1801
        %v1955 = vpop.f32.mrb[0].mxu0
        %v1956 = vadd.f32 %v1832, %v1955
        %v1957 = vpop.f32.mrb[0].mxu0
        %v1958 = vpop.f32.mrb[0].mxu0
        %v1959 = vadd.f32 %v1832, %v1958
        %v1960 = vpop.f32.mrb[0].mxu0
        %1961 = vmatprep.mubr.bf16.mxu0 0
        %1962 = vmatmul.mubr.bf16.gmra.mrb[0].mxu0 %v1802
        %v1963 = vpop.f32.mrb[0].mxu0
        %v1964 = vadd.f32 %v1832, %v1963
        %v1965 = vpop.f32.mrb[0].mxu0
        %v1966 = vpop.f32.mrb[0].mxu0
        %v1967 = vadd.f32 %v1832, %v1966
        %v1968 = vpop.f32.mrb[0].mxu0
        %1969 = vmatprep.mubr.bf16.mxu0 0
        %1970 = vmatmul.mubr.bf16.gmra.mrb[0].mxu0 %v1803
        %v1971 = vpop.f32.mrb[0].mxu0
        %v1972 = vadd.f32 %v1832, %v1971
        %v1973 = vpop.f32.mrb[0].mxu0
        %v1974 = vpop.f32.mrb[0].mxu0
        %v1975 = vadd.f32 %v1832, %v1974
        %v1976 = vpop.f32.mrb[0].mxu0
        %1977 = vmatprep.mubr.bf16.mxu0 0
        %1978 = vmatmul.mubr.bf16.gmra.mrb[0].mxu0 %v1804
        %v1979 = vpop.f32.mrb[0].mxu0
        %v1980 = vadd.f32 %v1832, %v1979
        %v1981 = vpop.f32.mrb[0].mxu0
        %v1982 = vpop.f32.mrb[0].mxu0
        %v1983 = vadd.f32 %v1832, %v1982
        %v1984 = vpop.f32.mrb[0].mxu0
        %1985 = vmatprep.mubr.bf16.mxu0 0
        %1986 = vmatmul.mubr.bf16.gmra.mrb[0].mxu0 %v1805
        %v1987 = vpop.f32.mrb[0].mxu0
        %v1988 = vadd.f32 %v1832, %v1987
        %v1989 = vpop.f32.mrb[0].mxu0
        %v1990 = vpop.f32.mrb[0].mxu0
        %v1991 = vadd.f32 %v1832, %v1990
        %v1992 = vpop.f32.mrb[0].mxu0
        %1993 = vmatprep.mubr.bf16.mxu0 0
        %1994 = vmatmul.mubr.bf16.gmra.mrb[0].mxu0 %v1806
        %v1995 = vpop.f32.mrb[0].mxu0
        %v1996 = vadd.f32 %v1832, %v1995
        %v1997 = vpop.f32.mrb[0].mxu0
        %v1998 = vpop.f32.mrb[0].mxu0
        %v1999 = vadd.f32 %v1832, %v1998
        %v2000 = vpop.f32.mrb[0].mxu0
        %2001 = vmatprep.mubr.bf16.mxu0 0
        %2002 = vmatmul.mubr.bf16.gmra.mrb[0].mxu0 %v1807
        %v2003 = vpop.f32.mrb[0].mxu0
        %v2004 = vadd.f32 %v1832, %v2003
        %v2005 = vpop.f32.mrb[0].mxu0
        %v2006 = vpop.f32.mrb[0].mxu0
        %v2007 = vadd.f32 %v1832, %v2006
        %v2008 = vpop.f32.mrb[0].mxu0
        %2009 = vmatprep.mubr.bf16.mxu0 0
        %2010 = vmatmul.mubr.bf16.gmra.mrb[0].mxu0 %v1808
        %v2011 = vpop.f32.mrb[0].mxu0
        %v2012 = vadd.f32 %v1832, %v2011
        %v2013 = vpop.f32.mrb[0].mxu0
        %v2014 = vpop.f32.mrb[0].mxu0
        %v2015 = vadd.f32 %v1832, %v2014
        %v2016 = vpop.f32.mrb[0].mxu0
        %2017 = vmatprep.mubr.bf16.mxu0 0
        %2018 = vmatmul.mubr.bf16.gmra.mrb[0].mxu0 %v1809
        %v2019 = vpop.f32.mrb[0].mxu0
        %v2020 = vadd.f32 %v1832, %v2019
        %v2021 = vpop.f32.mrb[0].mxu0
        %v2022 = vpop.f32.mrb[0].mxu0
        %v2023 = vadd.f32 %v1832, %v2022
        %v2024 = vpop.f32.mrb[0].mxu0
        %2025 = vmatprep.mubr.bf16.mxu0 0
        %2026 = vmatmul.mubr.bf16.gmra.mrb[0].mxu0 %v1810
        %v2027 = vpop.f32.mrb[0].mxu0
        %v2028 = vadd.f32 %v1832, %v2027
        %v2029 = vpop.f32.mrb[0].mxu0
        %v2030 = vpop.f32.mrb[0].mxu0
        %v2031 = vadd.f32 %v1832, %v2030
        %v2032 = vpop.f32.mrb[0].mxu0
        %2033 = vmatprep.mubr.bf16.mxu0 0
        %2034 = vmatmul.mubr.bf16.gmra.mrb[0].mxu0 %v1811
        %v2035 = vpop.f32.mrb[0].mxu0
        %v2036 = vadd.f32 %v1832, %v2035
        %v2037 = vpop.f32.mrb[0].mxu0
        %v2038 = vpop.f32.mrb[0].mxu0
        %v2039 = vadd.f32 %v1832, %v2038
        %v2040 = vpop.f32.mrb[0].mxu0
        %2041 = vdwg.mxu0
        %v2042 = vmax.f32 %v1916, 0.0
        %v2043 = vmax.f32 %v1919, 0.0
        %v2044 = vmax.f32 %v1924, 0.0
        %v2045 = vmax.f32 %v1927, 0.0
        %v2046 = vmax.f32 %v1932, 0.0
        %v2047 = vmax.f32 %v1935, 0.0
        %v2048 = vmax.f32 %v1940, 0.0
        %v2049 = vmax.f32 %v1943, 0.0
        %v2050 = vmax.f32 %v1948, 0.0
        %v2051 = vmax.f32 %v1951, 0.0
        %v2052 = vmax.f32 %v1956, 0.0
        %v2053 = vmax.f32 %v1959, 0.0
        %v2054 = vmax.f32 %v1964, 0.0
        %v2055 = vmax.f32 %v1967, 0.0
        %v2056 = vmax.f32 %v1972, 0.0
        %v2057 = vmax.f32 %v1975, 0.0
        %v2058 = vmax.f32 %v1980, 0.0
        %v2059 = vmax.f32 %v1983, 0.0
        %v2060 = vmax.f32 %v1988, 0.0
        %v2061 = vmax.f32 %v1991, 0.0
        %v2062 = vmax.f32 %v1996, 0.0
        %v2063 = vmax.f32 %v1999, 0.0
        %v2064 = vmax.f32 %v2004, 0.0
        %v2065 = vmax.f32 %v2007, 0.0
        %v2066 = vmax.f32 %v2012, 0.0
        %v2067 = vmax.f32 %v2015, 0.0
        %v2068 = vmax.f32 %v2020, 0.0
        %v2069 = vmax.f32 %v2023, 0.0
        %v2070 = vmax.f32 %v2028, 0.0
        %v2071 = vmax.f32 %v2031, 0.0
        %v2072 = vmax.f32 %v2036, 0.0
        %v2073 = vmax.f32 %v2039, 0.0
        %v2074 = vpack.c.bf16 %v2043, %v2042
        %v2075 = vpack.c.bf16 %v2045, %v2044
        %v2076 = vpack.c.bf16 %v2047, %v2046
        %v2077 = vpack.c.bf16 %v2049, %v2048
        %v2078 = vpack.c.bf16 %v2051, %v2050
        %v2079 = vpack.c.bf16 %v2053, %v2052
        %v2080 = vpack.c.bf16 %v2055, %v2054
        %v2081 = vpack.c.bf16 %v2057, %v2056
        %v2082 = vpack.c.bf16 %v2059, %v2058
        %v2083 = vpack.c.bf16 %v2061, %v2060
        %v2084 = vpack.c.bf16 %v2063, %v2062
        %v2085 = vpack.c.bf16 %v2065, %v2064
        %v2086 = vpack.c.bf16 %v2067, %v2066
        %v2087 = vpack.c.bf16 %v2069, %v2068
        %v2088 = vpack.c.bf16 %v2071, %v2070
        %v2089 = vpack.c.bf16 %v2073, %v2072
        %v2106 = vunpack.c.l.b16 %v2074
        %v2107 = vunpack.c.h.b16 %v2074
        %v2108 = vunpack.c.l.b16 %v2075
        %v2109 = vunpack.c.h.b16 %v2075
        %v2110 = vunpack.c.l.b16 %v2076
        %v2111 = vunpack.c.h.b16 %v2076
        %v2112 = vunpack.c.l.b16 %v2077
        %v2113 = vunpack.c.h.b16 %v2077
        %v2114 = vunpack.c.l.b16 %v2078
        %v2115 = vunpack.c.h.b16 %v2078
        %v2116 = vunpack.c.l.b16 %v2079
        %v2117 = vunpack.c.h.b16 %v2079
        %v2118 = vunpack.c.l.b16 %v2080
        %v2119 = vunpack.c.h.b16 %v2080
        %v2120 = vunpack.c.l.b16 %v2081
        %v2121 = vunpack.c.h.b16 %v2081
        %v2122 = vunpack.c.l.b16 %v2082
        %v2123 = vunpack.c.h.b16 %v2082
        %v2124 = vunpack.c.l.b16 %v2083
        %v2125 = vunpack.c.h.b16 %v2083
        %v2126 = vunpack.c.l.b16 %v2084
        %v2127 = vunpack.c.h.b16 %v2084
        %v2128 = vunpack.c.l.b16 %v2085
        %v2129 = vunpack.c.h.b16 %v2085
        %v2130 = vunpack.c.l.b16 %v2086
        %v2131 = vunpack.c.h.b16 %v2086
        %v2132 = vunpack.c.l.b16 %v2087
        %v2133 = vunpack.c.h.b16 %v2087
        %v2134 = vunpack.c.l.b16 %v2088
        %v2135 = vunpack.c.h.b16 %v2088
        %v2136 = vunpack.c.l.b16 %v2089
        %v2137 = vunpack.c.h.b16 %v2089
        %v2138 = vpack.c.b16 %v2106, %v2106
        %v2139 = vpack.c.b16 %v2107, %v2107
        %v2140 = vpack.c.b16 %v2108, %v2108
        %v2141 = vpack.c.b16 %v2109, %v2109
        %v2142 = vpack.c.b16 %v2110, %v2110
        %v2143 = vpack.c.b16 %v2111, %v2111
        %v2144 = vpack.c.b16 %v2112, %v2112
        %v2145 = vpack.c.b16 %v2113, %v2113
        %v2146 = vpack.c.b16 %v2114, %v2114
        %v2147 = vpack.c.b16 %v2115, %v2115
        %v2148 = vpack.c.b16 %v2116, %v2116
        %v2149 = vpack.c.b16 %v2117, %v2117
        %v2150 = vpack.c.b16 %v2118, %v2118
        %v2151 = vpack.c.b16 %v2119, %v2119
        %v2152 = vpack.c.b16 %v2120, %v2120
        %v2153 = vpack.c.b16 %v2121, %v2121
        %v2154 = vpack.c.b16 %v2122, %v2122
        %v2155 = vpack.c.b16 %v2123, %v2123
        %v2156 = vpack.c.b16 %v2124, %v2124
        %v2157 = vpack.c.b16 %v2125, %v2125
        %v2158 = vpack.c.b16 %v2126, %v2126
        %v2159 = vpack.c.b16 %v2127, %v2127
        %v2160 = vpack.c.b16 %v2128, %v2128
        %v2161 = vpack.c.b16 %v2129, %v2129
        %v2162 = vpack.c.b16 %v2130, %v2130
        %v2163 = vpack.c.b16 %v2131, %v2131
        %v2164 = vpack.c.b16 %v2132, %v2132
        %v2165 = vpack.c.b16 %v2133, %v2133
        %v2166 = vpack.c.b16 %v2134, %v2134
        %v2167 = vpack.c.b16 %v2135, %v2135
        %v2168 = vpack.c.b16 %v2136, %v2136
        %v2169 = vpack.c.b16 %v2137, %v2137
        %2202 = vst [vmem:[%s202] sm:$0xf] %v2138
        %2203 = vst [vmem:[%s202 + $0x4] sm:$0xf] %v2139
        %2204 = vst [vmem:[%s202 + $0x8] sm:$0xf] %v2140
        %2205 = vst [vmem:[%s202 + $0xc] sm:$0xf] %v2141
        %2206 = vst [vmem:[%s202 + $0x10] sm:$0xf] %v2142
        %2207 = vst [vmem:[%s202 + $0x14] sm:$0xf] %v2143
        %2208 = vst [vmem:[%s202 + $0x18] sm:$0xf] %v2144
        %2209 = vst [vmem:[%s202 + $0x1c] sm:$0xf] %v2145
        %2210 = vst [vmem:[%s202 + $0x20] sm:$0xf] %v2146
        %2211 = vst [vmem:[%s202 + $0x24] sm:$0xf] %v2147
        %2212 = vst [vmem:[%s202 + $0x28] sm:$0xf] %v2148
        %2213 = vst [vmem:[%s202 + $0x2c] sm:$0xf] %v2149
        %2214 = vst [vmem:[%s202 + $0x30] sm:$0xf] %v2150
        %2215 = vst [vmem:[%s202 + $0x34] sm:$0xf] %v2151
        %2216 = vst [vmem:[%s202 + $0x38] sm:$0xf] %v2152
        %2217 = vst [vmem:[%s202 + $0x3c] sm:$0xf] %v2153
        %2218 = vst [vmem:[%s202 + $0x40] sm:$0xf] %v2154
        %2219 = vst [vmem:[%s202 + $0x44] sm:$0xf] %v2155
        %2220 = vst [vmem:[%s202 + $0x48] sm:$0xf] %v2156
        %2221 = vst [vmem:[%s202 + $0x4c] sm:$0xf] %v2157
        %2222 = vst [vmem:[%s202 + $0x50] sm:$0xf] %v2158
        %2223 = vst [vmem:[%s202 + $0x54] sm:$0xf] %v2159
        %2224 = vst [vmem:[%s202 + $0x58] sm:$0xf] %v2160
        %2225 = vst [vmem:[%s202 + $0x5c] sm:$0xf] %v2161
        %2226 = vst [vmem:[%s202 + $0x60] sm:$0xf] %v2162
        %2227 = vst [vmem:[%s202 + $0x64] sm:$0xf] %v2163
        %2228 = vst [vmem:[%s202 + $0x68] sm:$0xf] %v2164
        %2229 = vst [vmem:[%s202 + $0x6c] sm:$0xf] %v2165
        %2230 = vst [vmem:[%s202 + $0x70] sm:$0xf] %v2166
        %2231 = vst [vmem:[%s202 + $0x74] sm:$0xf] %v2167
        %2232 = vst [vmem:[%s202 + $0x78] sm:$0xf] %v2168
        %2233 = vst [vmem:[%s202 + $0x7c] sm:$0xf] %v2169
        %s2234 = sand.u32 %s98, 1
        %s2235 = scalar_lea.sflag [#allocation4], %s2234
        %s2236 = sand.u32 %s98, 1
        %s2237 = smul.addr %s2236, 128
        %s2238 = scalar_lea.vmem [#allocation3], %s2237
        %s2239 = sand.u32 %s124, 1
        %s2240 = scalar_lea.sflag [#allocation6], %s2239
        %s2241 = sand.u32 %s124, 1
        %s2242 = smul.addr %s2241, 128
        %s2243 = scalar_lea.vmem [#allocation5], %s2242
        // Predicated region
        $region33: #{tpu_custom_call.1} parent=31 // pred_check
          %p2244 = pneg %p108
        $region34: #{tpu_custom_call.1} parent=31 // pred_check_branch
          %2246 = sbr.rel (%p2244) target = $region36
        $region35: #{tpu_custom_call.1} parent=31 // pred_region
          %s2247 = smul.u32 32, %s22
          %s2249 = ssub.s32 2048, 2048
          %2250 = vsyncadd %s2235, %s2249
          %s2251 = smul.addr %s2247, 64
          %s2252 = scalar_lea.hbm %s3, %s2251
          %s2253 = sshll.u32 %s2238, 4
          %s2254 = int_to_ptr.vmem [resolvable:$true] %s2253
          %2259 = dma.vmem_to_hbm [thread:$0]  %s2254, 2048, %s2252, %s2235, 64, 64, 4
        $region36: #{tpu_custom_call.1} parent=31 // pred_fallthru
          _
        // Predicated region
        $region37: #{tpu_custom_call.1} parent=31 // pred_check
          %p2260 = pneg %p134
        $region38: #{tpu_custom_call.1} parent=31 // pred_check_branch
          %2262 = sbr.rel (%p2260) target = $region40
        $region39: #{tpu_custom_call.1} parent=31 // pred_region
          %s2263 = smul.u32 32, %s22
          %s2265 = ssub.s32 2048, 2048
          %2266 = vsyncadd %s2240, %s2265
          %s2267 = smul.addr %s2263, 64
          %s2268 = scalar_lea.hbm %s4, %s2267
          %s2269 = sshll.u32 %s2243, 4
          %s2270 = int_to_ptr.vmem [resolvable:$true] %s2269
          %2275 = dma.vmem_to_hbm [thread:$0]  %s2270, 2048, %s2268, %s2240, 64, 64, 4
        $region40: #{tpu_custom_call.1} parent=31 // pred_fallthru
          _
      $region32: #{tpu_custom_call.1} parent=5 // pred_fallthru
        _
      %p2276 = scmp.le.s32.totalorder 2, %s17
      // Predicated region
      $region41: #{tpu_custom_call.1} parent=5 // pred_check
        %p2277 = pneg %p2276
      $region42: #{tpu_custom_call.1} parent=5 // pred_check_branch
        %2279 = sbr.rel (%p2277) target = $region44
      $region43: #{tpu_custom_call.1} parent=5 // pred_region
        %s2280 = ssub.s32 %s17, 2
        // Predicated region
        $region45: #{tpu_custom_call.1} parent=43 // pred_check
          %p2281 = pneg %p114
        $region46: #{tpu_custom_call.1} parent=43 // pred_check_branch
          %2283 = sbr.rel (%p2281) target = $region48
        $region47: #{tpu_custom_call.1} parent=43 // pred_region
          %s2284 = sand.u32 %s99, 1
          %s2285 = scalar_lea.sflag [#allocation4], %s2284
          %s2286 = sand.u32 %s99, 1
          %s2287 = smul.addr %s2286, 128
          %s2288 = scalar_lea.vmem [#allocation3], %s2287
          %2289 = dma.done %s2285, 2048
        $region48: #{tpu_custom_call.1} parent=43 // pred_fallthru
          _
        // Predicated region
        $region49: #{tpu_custom_call.1} parent=43 // pred_check
          %p2290 = pneg %p140
        $region50: #{tpu_custom_call.1} parent=43 // pred_check_branch
          %2292 = sbr.rel (%p2290) target = $region52
        $region51: #{tpu_custom_call.1} parent=43 // pred_region
          %s2293 = sand.u32 %s125, 1
          %s2294 = scalar_lea.sflag [#allocation6], %s2293
          %s2295 = sand.u32 %s125, 1
          %s2296 = smul.addr %s2295, 128
          %s2297 = scalar_lea.vmem [#allocation5], %s2296
          %2298 = dma.done %s2294, 2048
        $region52: #{tpu_custom_call.1} parent=43 // pred_fallthru
          _
      $region44: #{tpu_custom_call.1} parent=5 // pred_fallthru
        _
    $region6: #{tpu_custom_call.1} parent=1 // loop_footer
      %s21 = sadd.s32 1, %s17
    $region7: #{tpu_custom_call.1} parent=1 // loop_footer_branch
      %16 = sbr.rel target = $region3
    $region8: #{tpu_custom_call.1} parent=1 // loop_exit
      _
    %2299 = vsyncpa [#allocation4], 1
    %s2300 = scalar_lea.sflag [#allocation4], 1
    %2301 = vsyncpa %s2300, 1
    %2302 = vsyncpa [#allocation6], 1
    %s2303 = scalar_lea.sflag [#allocation6], 1
    %2304 = vsyncpa %s2303, 1

</llo_original>
